<compile_context>
chip_gen: v6e
topology: v6e:2x2x1
jax: 0.10.0
libtpu: 0.0.40
codegen_flags: <defaults>
</compile_context>

<pallas_src>
import jax
import jax.numpy as jnp
from jax import lax
from jax.experimental import pallas as pl
from jax.experimental.pallas import tpu as pltpu

F32 = jnp.float32
BF16 = jnp.bfloat16


def _round_up(n, m):
    return ((n + m - 1) // m) * m


# ------------------------------ fused kernel ---------------------------------

def _make_kernel(H, W, Cinp, Cp):
    HW = H * W

    def kernel(x_ref, temb_ref, w1_ref, w2_ref, wsc_ref, wqkv_ref, wp_ref,
               bias_ref, mask_ref, out_ref, im1_ref, im2_ref):
        # x_ref   : (1, Cinp, HW) f32   one batch element, channels on sublanes
        # temb_ref: (1, Cp, 1)    f32   precomputed time-embedding column
        # w1_ref  : (Cp, 9*Cinp)  bf16  conv1 taps, BN1 folded  (tap-major, channel-minor cols)
        # w2_ref  : (Cp, 9*Cp)    bf16  conv2 taps, BN2 folded
        # wsc_ref : (Cp, Cinp)    bf16  1x1 shortcut
        # wqkv_ref: (3*Cp, Cp)    bf16  [Wq/sqrt(C) ; Wk ; Wv]
        # wp_ref  : (Cp, Cp)      bf16  attention output projection
        # bias_ref: (Cp, 6)       f32   cols [bn1, bn2+sc_b, bq/sqrt(C), bk, bv, bp]
        # mask_ref: (9, HW)       f32   zero-padding masks for the 9 conv taps
        # out_ref : (1, Cp, HW)   f32
        # im1_ref : (9*Cinp, HW)  f32 scratch (stacked conv1 taps)
        # im2_ref : (9*Cp,  HW)   f32 scratch (stacked conv2 taps)
        def bcol(i):                                  # (Cp, 1) bias column
            return bias_ref[:, pl.ds(i, 1)]

        def im2col_into(src, buf_ref, cs):
            # 3x3, padding=1: 9 shifted (pltpu.roll) + masked copies stacked tap-major into
            # an aligned VMEM scratch; one bf16 MXU matmul consumes all taps at once.
            for tap in range(9):
                dh, dw = tap // 3 - 1, tap % 3 - 1
                if dh == 0 and dw == 0:
                    s = src
                else:
                    s = pltpu.roll(src, (-(dh * W + dw)) % HW, axis=1)
                    s = s * mask_ref[pl.ds(tap, 1), :]
                buf_ref[pl.ds(tap * cs, cs), :] = s
            return buf_ref[...].astype(BF16)          # (9*cs, HW) bf16

        x = x_ref[0]                                  # (Cinp, HW) f32
        temb = temb_ref[0]                            # (Cp, 1)   f32

        # ---- conv1 (3x3, BN1 folded) + ReLU + time embedding ----
        h = jnp.dot(w1_ref[...], im2col_into(x, im1_ref, Cinp),
                    preferred_element_type=F32)       # (Cp, HW)
        h = jnp.maximum(h + bcol(0), 0.0) + temb

        # ---- 1x1 shortcut + conv2 (3x3, BN2 folded); Dropout(0.1) = eval identity ----
        z = jnp.dot(wsc_ref[...], x.astype(BF16), preferred_element_type=F32)
        z = z + jnp.dot(w2_ref[...], im2col_into(h, im2_ref, Cp),
                        preferred_element_type=F32) + bcol(1)   # (Cp, HW)

        # ---- AttnBlock (group_norm = Identity since C < 32); 1/sqrt(C) folded into Wq/bq ----
        zb = z.astype(BF16)
        qkv = jnp.dot(wqkv_ref[...], zb, preferred_element_type=F32)   # (3Cp, HW) f32
        q = qkv[0:Cp] + bcol(2)
        k = qkv[Cp:2 * Cp] + bcol(3)
        v = qkv[2 * Cp:3 * Cp] + bcol(4)

        # scores: contract both (Cp, HW) operands over the channel (sublane) axis -> (HW, HW)
        att = lax.dot_general(q.astype(BF16), k.astype(BF16),
                              (((0,), (0,)), ((), ())), preferred_element_type=F32)
        att = jnp.exp(att - jnp.max(att, axis=-1, keepdims=True))
        att = att * pl.reciprocal(jnp.sum(att, axis=-1, keepdims=True), approx=True)

        # att@v and projection keep the (HW,HW) matrix as LHS, contracting its lane axis
        hoT = lax.dot_general(att.astype(BF16), v.astype(BF16),
                              (((1,), (1,)), ((), ())), preferred_element_type=F32)  # (HW, Cp)
        proj = lax.dot_general(wp_ref[...], hoT.astype(BF16),
                               (((1,), (1,)), ((), ())), preferred_element_type=F32) # (Cp, HW)
        out_ref[0] = z + proj + bcol(5)

    return kernel


# ------------------------- parameter folding / packing -----------------------

def _time_mlp(t, tw1T, tb1, tw2T, tb2):
    """Linear(512,C) -> Swish -> Linear(C,C), bf16 matmuls / f32 accumulation (shared by the
    Pallas wrapper and the matched reference so both see identical values)."""
    h = jnp.dot(t.astype(BF16), tw1T, preferred_element_type=F32) + tb1
    h = h * (1.0 / (1.0 + jnp.exp(-h)))
    return jnp.dot(h.astype(BF16), tw2T, preferred_element_type=F32) + tb2


def _fold_params(p):
    """Fold BN / attention scale into the weights, round to bf16 once (trace time), and pack
    padded lane/sublane-aligned kernel arrays.  Also returns right-multiply forms of the same
    bf16 values for the precision-matched reference."""
    C, Cin = p["conv1_w"].shape[0], p["conv1_w"].shape[1]
    if Cin >= 32 or C >= 32:
        # TODO(synk): GroupNorm(32, C) paths (norm1 / attention group_norm) not implemented.
        raise NotImplementedError("kernel assumes in/out channels < 32 (GroupNorm = Identity)")
    Cp, Cinp = _round_up(C, 8), _round_up(Cin, 8)
    eps = 1e-5
    s1 = p["bn1_gamma"] / jnp.sqrt(p["bn1_var"] + eps)
    b1 = p["bn1_beta"] - p["bn1_mean"] * s1
    s2 = p["bn2_gamma"] / jnp.sqrt(p["bn2_var"] + eps)
    b2 = p["bn2_beta"] - p["bn2_mean"] * s2
    scale = float(C) ** -0.5

    # (O, kh, kw, I) folded conv weights, bf16-rounded exactly as used on the MXU
    w1 = (jnp.transpose(p["conv1_w"], (0, 2, 3, 1)) * s1[:, None, None, None]).astype(BF16)
    w2 = (jnp.transpose(p["conv2_w"], (0, 2, 3, 1)) * s2[:, None, None, None]).astype(BF16)
    wq = (p["wq"] * scale).astype(BF16)
    wk, wv = p["wk"].astype(BF16), p["wv"].astype(BF16)
    wp, wsc = p["wp"].astype(BF16), p["sc_w"].astype(BF16)
    bq = p["bq"] * scale
    tw1T, tw2T = p["t_w1"].astype(BF16).T, p["t_w2"].astype(BF16).T

    def pad2(a, r, c):
        return jnp.pad(a, ((0, r - a.shape[0]), (0, c - a.shape[1])))

    pad1 = lambda v: jnp.pad(v, (0, Cp - C))
    w1_p = pad2(jnp.pad(w1, ((0, 0), (0, 0), (0, 0), (0, Cinp - Cin))).reshape(C, 9 * Cinp),
                Cp, 9 * Cinp)                                                     # (Cp, 9*Cinp)
    w2_p = pad2(jnp.pad(w2, ((0, 0), (0, 0), (0, 0), (0, Cp - C))).reshape(C, 9 * Cp),
                Cp, 9 * Cp)                                                       # (Cp, 9*Cp)
    packed = {
        "w1": w1_p, "w2": w2_p,
        "wsc": pad2(wsc, Cp, Cinp),
        "wqkv": jnp.concatenate([pad2(wq, Cp, Cp), pad2(wk, Cp, Cp), pad2(wv, Cp, Cp)], axis=0),
        "wp": pad2(wp, Cp, Cp),
        "bias": jnp.stack([pad1(b1), pad1(b2 + p["sc_b"]), pad1(bq),
                           pad1(p["bk"]), pad1(p["bv"]), pad1(p["bp"])], axis=1),  # (Cp, 6)
        "t_w1T": tw1T, "t_b1": p["t_b1"], "t_w2T": tw2T, "t_b2": p["t_b2"],
    }

    # matched-precision reference weights (right-multiply forms, identical bf16 values)
    fold = {
        "w1": jnp.transpose(w1, (1, 2, 3, 0)).reshape(9 * Cin, C),
        "w2": jnp.transpose(w2, (1, 2, 3, 0)).reshape(9 * C, C),
        "ws": wsc.T, "wq": wq.T, "wk": wk.T, "wv": wv.T, "wp": wp.T,
        "b1": b1, "bz": b2 + p["sc_b"], "bq": bq, "bk": p["bk"], "bv": p["bv"], "bp": p["bp"],
        "t_w1T": tw1T, "t_b1": p["t_b1"], "t_w2T": tw2T, "t_b2": p["t_b2"],
    }
    return packed, fold


# --------------------------------- wrapper ------------------------------------

def forward_pallas(x, t, packed, *, C):
    """x: (B, Cin, H, W) f32 (NCHW, like the PyTorch module), t: (B, 512) f32."""
    B, Cin, H, W = x.shape
    HW = H * W
    Cp = packed["bias"].shape[0]
    Cinp = packed["wsc"].shape[1]

    # time-embedding MLP for the whole batch in plain XLA (tiny; keeps it out of the kernel)
    temb = _time_mlp(t, packed["t_w1T"], packed["t_b1"], packed["t_w2T"], packed["t_b2"])
    temb = jnp.pad(temb, ((0, 0), (0, Cp - C))).reshape(B, Cp, 1)

    # zero-padding masks for the 9 conv taps (trace-time constants)
    ii = jnp.arange(HW, dtype=jnp.int32) // W
    jj = jnp.arange(HW, dtype=jnp.int32) % W
    masks = jnp.stack([((ii + dh >= 0) & (ii + dh < H) & (jj + dw >= 0) & (jj + dw < W))
                       for dh in (-1, 0, 1) for dw in (-1, 0, 1)]).astype(F32)      # (9, HW)

    x3 = jnp.pad(x.reshape(B, Cin, HW), ((0, 0), (0, Cinp - Cin), (0, 0)))          # (B, Cinp, HW)

    batched = lambda shape: pl.BlockSpec((1,) + shape, lambda b: (b, 0, 0))
    shared = lambda shape: pl.BlockSpec(shape, lambda b: (0,) * len(shape))

    out = pl.pallas_call(
        _make_kernel(H, W, Cinp, Cp),
        out_shape=jax.ShapeDtypeStruct((B, Cp, HW), F32),
        grid=(B,),
        in_specs=[
            batched((Cinp, HW)),           # x
            batched((Cp, 1)),              # temb
            shared((Cp, 9 * Cinp)),        # conv1 weight (bf16, BN1 folded)
            shared((Cp, 9 * Cp)),          # conv2 weight (bf16, BN2 folded)
            shared((Cp, Cinp)),            # shortcut weight (bf16)
            shared((3 * Cp, Cp)),          # q|k|v weight (bf16, 1/sqrt(C) folded into q)
            shared((Cp, Cp)),              # proj weight (bf16)
            shared((Cp, 6)),               # biases (f32)
            shared((9, HW)),               # conv tap masks (f32)
        ],
        out_specs=batched((Cp, HW)),
        scratch_shapes=[pltpu.VMEM((9 * Cinp, HW), F32),
                        pltpu.VMEM((9 * Cp, HW), F32)],
        compiler_params=pltpu.CompilerParams(dimension_semantics=("parallel",)),
    )(x3, temb, packed["w1"], packed["w2"], packed["wsc"], packed["wqkv"],
      packed["wp"], packed["bias"], masks)

    return out[:, :C, :].reshape(B, C, H, W)


# ------------------------------- references -----------------------------------

def im2col3x3(x_nhwc):
    """(B, H, W, C) -> (B, H*W, 9*C), taps (kh,kw)-major / channel-minor (matches packing)."""
    B, H, W, C = x_nhwc.shape
    xp = jnp.pad(x_nhwc, ((0, 0), (1, 1), (1, 1), (0, 0)))
    cols = jnp.concatenate([xp[:, dh:dh + H, dw:dw + W, :]
                            for dh in range(3) for dw in range(3)], axis=-1)
    return cols.reshape(B, H * W, 9 * C)


def forward_ref_matched(x, t, f):
    """Same math as the kernel (folded bf16 weights, bf16 MXU inputs, f32 accumulation and
    elementwise) written in plain JAX -- the tight numerical reference."""
    B, Cin, H, W = x.shape
    C = f["b1"].shape[0]
    HW = H * W
    mm = lambda a, b: jnp.dot(a, b, preferred_element_type=F32)

    temb = _time_mlp(t, f["t_w1T"], f["t_b1"], f["t_w2T"], f["t_b2"])        # (B, C) f32

    xb = jnp.transpose(x, (0, 2, 3, 1)).astype(BF16)                          # NHWC, bf16
    h = mm(im2col3x3(xb), f["w1"]) + f["b1"]
    h = jnp.maximum(h, 0.0) + temb[:, None, :]
    z = mm(im2col3x3(h.reshape(B, H, W, C).astype(BF16)), f["w2"]) \
        + mm(xb.reshape(B, HW, Cin), f["ws"]) + f["bz"]

    zb = z.astype(BF16)
    q = mm(zb, f["wq"]) + f["bq"]                                             # 1/sqrt(C) folded
    k = mm(zb, f["wk"]) + f["bk"]
    v = mm(zb, f["wv"]) + f["bv"]
    att = jnp.einsum("bic,bjc->bij", q.astype(BF16), k.astype(BF16),
                     preferred_element_type=F32)
    att = jax.nn.softmax(att, axis=-1)
    ho = jnp.einsum("bij,bjc->bic", att.astype(BF16), v.astype(BF16),
                    preferred_element_type=F32)
    out = z + mm(ho.astype(BF16), f["wp"]) + f["bp"]
    return jnp.transpose(out.reshape(B, H, W, C), (0, 3, 1, 2))


def forward_ref_f32(x, t, p):
    """Faithful f32 reference of the PyTorch module (eval mode), NCHW in / NCHW out."""
    B, Cin, H, W = x.shape
    C = p["conv1_w"].shape[0]
    HW = H * W
    eps = 1e-5
    s1 = p["bn1_gamma"] / jnp.sqrt(p["bn1_var"] + eps)
    b1 = p["bn1_beta"] - p["bn1_mean"] * s1
    s2 = p["bn2_gamma"] / jnp.sqrt(p["bn2_var"] + eps)
    b2 = p["bn2_beta"] - p["bn2_mean"] * s2

    temb = t @ p["t_w1"].T + p["t_b1"]
    temb = temb * (1.0 / (1.0 + jnp.exp(-temb)))
    temb = temb @ p["t_w2"].T + p["t_b2"]                            # (B, C)

    xh = jnp.transpose(x, (0, 2, 3, 1))                              # NHWC
    w1 = jnp.transpose(p["conv1_w"], (2, 3, 1, 0)).reshape(9 * Cin, C)
    w2 = jnp.transpose(p["conv2_w"], (2, 3, 1, 0)).reshape(9 * C, C)

    h = im2col3x3(xh) @ w1
    h = jnp.maximum(h * s1 + b1, 0.0) + temb[:, None, :]
    h2 = (im2col3x3(h.reshape(B, H, W, C)) @ w2) * s2 + b2
    sc = xh.reshape(B, HW, Cin) @ p["sc_w"].T + p["sc_b"]
    z = h2 + sc

    q = z @ p["wq"].T + p["bq"]
    k = z @ p["wk"].T + p["bk"]
    v = z @ p["wv"].T + p["bv"]
    att = jnp.einsum("bic,bjc->bij", q, k) * (float(C) ** -0.5)
    att = jax.nn.softmax(att, axis=-1)
    ho = jnp.einsum("bij,bjc->bic", att, v) @ p["wp"].T + p["bp"]
    out = z + ho                                                     # (B, HW, C)
    return jnp.transpose(out.reshape(B, H, W, C), (0, 3, 1, 2))


# ------------------------------ parameter init --------------------------------

def init_params(key, Cin, C):
    ks = jax.random.split(key, 12)

    def xavier(k, shape, fan_in, fan_out, gain=1.0):
        a = gain * (6.0 / (fan_in + fan_out)) ** 0.5
        return jax.random.uniform(k, shape, F32, -a, a)

    def torch_default(k, shape, fan_in):
        a = 1.0 / (fan_in ** 0.5)
        return jax.random.uniform(k, shape, F32, -a, a)

    zeros = lambda *s: jnp.zeros(s, F32)
    ones = lambda *s: jnp.ones(s, F32)
    return {
        # conv weights, OIHW as in PyTorch (xavier_uniform as in Resnetbasic_Block.initialize)
        "conv1_w": xavier(ks[0], (C, Cin, 3, 3), Cin * 9, C * 9),
        "conv2_w": xavier(ks[1], (C, C, 3, 3), C * 9, C * 9),
        # BatchNorm2d affine + running stats (eval mode)
        "bn1_gamma": ones(C), "bn1_beta": zeros(C), "bn1_mean": zeros(C), "bn1_var": ones(C),
        "bn2_gamma": ones(C), "bn2_beta": zeros(C), "bn2_mean": zeros(C), "bn2_var": ones(C),
        # 1x1 shortcut conv (PyTorch default init)
        "sc_w": torch_default(ks[2], (C, Cin), Cin),
        "sc_b": torch_default(ks[3], (C,), Cin),
        # time-embedding MLP: Linear(512, C) -> Swish -> Linear(C, C)
        "t_w1": torch_default(ks[4], (C, 512), 512),
        "t_b1": torch_default(ks[5], (C,), 512),
        "t_w2": torch_default(ks[6], (C, C), C),
        "t_b2": torch_default(ks[7], (C,), C),
        # attention 1x1 projections (xavier_uniform, zero bias; proj gain 1e-5)
        "wq": xavier(ks[8], (C, C), C, C), "bq": zeros(C),
        "wk": xavier(ks[9], (C, C), C, C), "bk": zeros(C),
        "wv": xavier(ks[10], (C, C), C, C), "bv": zeros(C),
        "wp": xavier(ks[11], (C, C), C, C, gain=1e-5), "bp": zeros(C),
    }


# ----------------------------------- main --------------------------------------

if __name__ == "__main__":
    B, Cin, C, H, W = 2, 4, 8, 16, 16       # channels < 32 -> norm1 / group_norm = Identity
    key = jax.random.PRNGKey(0)
    kx, kt, kp = jax.random.split(key, 3)
    x = jax.random.normal(kx, (B, Cin, H, W), F32)   # NCHW, like the PyTorch module
    t = jax.random.normal(kt, (B, 512), F32)
    params = init_params(kp, Cin, C)

    packed, fold = _fold_params(params)
    run = jax.jit(forward_pallas, static_argnames=("C",))
    out = jax.block_until_ready(run(x, t, packed, C=C))
    assert out.shape == (B, C, H, W), out.shape

    # tight check: plain-JAX reference with the exact same folded bf16 weights / cast points
    ref_matched = forward_ref_matched(x, t, fold)
    err_tight = float(jnp.max(jnp.abs(out - ref_matched)))
    # loose check: faithful f32 reference of the PyTorch module (bounds total bf16 drift)
    ref_f32 = forward_ref_f32(x, t, params)
    err_loose = float(jnp.max(jnp.abs(out - ref_f32)))

    assert err_tight < 2e-3, f"kernel vs matched-precision reference: {err_tight}"
    assert err_loose < 1e-1, f"kernel vs f32 reference: {err_loose}"
    print("KERNEL_OK")
</pallas_src>

<mosaic_0001>
module attributes {stable_mosaic.version = 11 : i64} {
  func.func @kernel(%arg0: i32, %arg1: memref<1x8x256xf32, #tpu.memory_space<vmem>>, %arg2: memref<1x8x1xf32, #tpu.memory_space<vmem>>, %arg3: memref<8x72xbf16, #tpu.memory_space<vmem>>, %arg4: memref<8x72xbf16, #tpu.memory_space<vmem>>, %arg5: memref<8x8xbf16, #tpu.memory_space<vmem>>, %arg6: memref<24x8xbf16, #tpu.memory_space<vmem>>, %arg7: memref<8x8xbf16, #tpu.memory_space<vmem>>, %arg8: memref<8x6xf32, #tpu.memory_space<vmem>>, %arg9: memref<9x256xf32, #tpu.memory_space<vmem>>, %arg10: memref<1x8x256xf32, #tpu.memory_space<vmem>>, %arg11: memref<72x256xf32, #tpu.memory_space<vmem>>, %arg12: memref<72x256xf32, #tpu.memory_space<vmem>>) attributes {dimension_semantics = [#tpu.dimension_semantics<parallel>], iteration_bounds = array<i64: 2>, scalar_prefetch = 0 : i64, scratch_operands = 2 : i64, tpu.core_type = #tpu.core_type<tc>, window_params = [{transform_indices = @transform_0, window_bounds = array<i64: 1, 8, 256>}, {transform_indices = @transform_1, window_bounds = array<i64: 1, 8, 1>}, {pipeline_mode = #tpu.pipeline_mode<synchronous>, transform_indices = @transform_2, window_bounds = array<i64: 8, 72>}, {pipeline_mode = #tpu.pipeline_mode<synchronous>, transform_indices = @transform_3, window_bounds = array<i64: 8, 72>}, {pipeline_mode = #tpu.pipeline_mode<synchronous>, transform_indices = @transform_4, window_bounds = array<i64: 8, 8>}, {pipeline_mode = #tpu.pipeline_mode<synchronous>, transform_indices = @transform_5, window_bounds = array<i64: 24, 8>}, {pipeline_mode = #tpu.pipeline_mode<synchronous>, transform_indices = @transform_6, window_bounds = array<i64: 8, 8>}, {pipeline_mode = #tpu.pipeline_mode<synchronous>, transform_indices = @transform_7, window_bounds = array<i64: 8, 6>}, {pipeline_mode = #tpu.pipeline_mode<synchronous>, transform_indices = @transform_8, window_bounds = array<i64: 9, 256>}, {transform_indices = @transform_9, window_bounds = array<i64: 1, 8, 256>}]} {
    %c0 = arith.constant 0 : index
    %c0_0 = arith.constant 0 : index
    %c0_1 = arith.constant 0 : index
    %0 = vector.load %arg1[%c0, %c0_0, %c0_1] : memref<1x8x256xf32, #tpu.memory_space<vmem>>, vector<1x8x256xf32>
    %1 = vector.shape_cast %0 : vector<1x8x256xf32> to vector<8x256xf32>
    %c0_2 = arith.constant 0 : index
    %c0_3 = arith.constant 0 : index
    %c0_4 = arith.constant 0 : index
    %2 = vector.load %arg2[%c0_2, %c0_3, %c0_4] : memref<1x8x1xf32, #tpu.memory_space<vmem>>, vector<1x8x1xf32>
    %3 = vector.shape_cast %2 : vector<1x8x1xf32> to vector<8x1xf32>
    %c0_5 = arith.constant 0 : index
    %c0_6 = arith.constant 0 : index
    %4 = vector.load %arg3[%c0_5, %c0_6] : memref<8x72xbf16, #tpu.memory_space<vmem>>, vector<8x72xbf16>
    %c17_i32 = arith.constant 17 : i32
    %5 = tpu.dynamic_rotate %1 by %c17_i32 dim 1 : vector<8x256xf32>, i32 -> vector<8x256xf32>
    %c0_7 = arith.constant 0 : index
    %c0_8 = arith.constant 0 : index
    %6 = vector.load %arg9[%c0_7, %c0_8] : memref<9x256xf32, #tpu.memory_space<vmem>>, vector<1x256xf32>
    %7 = vector.broadcast %6 : vector<1x256xf32> to vector<8x256xf32>
    %8 = arith.mulf %5, %7 : vector<8x256xf32>
    %c0_9 = arith.constant 0 : index
    %c0_10 = arith.constant 0 : index
    %9 = vector.load %arg11[%c0_9, %c0_10] : memref<72x256xf32, #tpu.memory_space<vmem>>, vector<8x256xf32>
    tpu.vector_store %arg11[%c0_9, %c0_10], %8 {strides = array<i32>} : memref<72x256xf32, #tpu.memory_space<vmem>>, vector<8x256xf32>,
    %c16_i32 = arith.constant 16 : i32
    %10 = tpu.dynamic_rotate %1 by %c16_i32 dim 1 : vector<8x256xf32>, i32 -> vector<8x256xf32>
    %c1 = arith.constant 1 : index
    %c0_11 = arith.constant 0 : index
    %11 = vector.load %arg9[%c1, %c0_11] : memref<9x256xf32, #tpu.memory_space<vmem>>, vector<1x256xf32>
    %12 = vector.broadcast %11 : vector<1x256xf32> to vector<8x256xf32>
    %13 = arith.mulf %10, %12 : vector<8x256xf32>
    %c8 = arith.constant 8 : index
    %c0_12 = arith.constant 0 : index
    %14 = vector.load %arg11[%c8, %c0_12] : memref<72x256xf32, #tpu.memory_space<vmem>>, vector<8x256xf32>
    tpu.vector_store %arg11[%c8, %c0_12], %13 {strides = array<i32>} : memref<72x256xf32, #tpu.memory_space<vmem>>, vector<8x256xf32>,
    %c15_i32 = arith.constant 15 : i32
    %15 = tpu.dynamic_rotate %1 by %c15_i32 dim 1 : vector<8x256xf32>, i32 -> vector<8x256xf32>
    %c2 = arith.constant 2 : index
    %c0_13 = arith.constant 0 : index
    %16 = vector.load %arg9[%c2, %c0_13] : memref<9x256xf32, #tpu.memory_space<vmem>>, vector<1x256xf32>
    %17 = vector.broadcast %16 : vector<1x256xf32> to vector<8x256xf32>
    %18 = arith.mulf %15, %17 : vector<8x256xf32>
    %c16 = arith.constant 16 : index
    %c0_14 = arith.constant 0 : index
    %19 = vector.load %arg11[%c16, %c0_14] : memref<72x256xf32, #tpu.memory_space<vmem>>, vector<8x256xf32>
    tpu.vector_store %arg11[%c16, %c0_14], %18 {strides = array<i32>} : memref<72x256xf32, #tpu.memory_space<vmem>>, vector<8x256xf32>,
    %c1_i32 = arith.constant 1 : i32
    %20 = tpu.dynamic_rotate %1 by %c1_i32 dim 1 : vector<8x256xf32>, i32 -> vector<8x256xf32>
    %c3 = arith.constant 3 : index
    %c0_15 = arith.constant 0 : index
    %21 = vector.load %arg9[%c3, %c0_15] : memref<9x256xf32, #tpu.memory_space<vmem>>, vector<1x256xf32>
    %22 = vector.broadcast %21 : vector<1x256xf32> to vector<8x256xf32>
    %23 = arith.mulf %20, %22 : vector<8x256xf32>
    %c24 = arith.constant 24 : index
    %c0_16 = arith.constant 0 : index
    %24 = vector.load %arg11[%c24, %c0_16] : memref<72x256xf32, #tpu.memory_space<vmem>>, vector<8x256xf32>
    tpu.vector_store %arg11[%c24, %c0_16], %23 {strides = array<i32>} : memref<72x256xf32, #tpu.memory_space<vmem>>, vector<8x256xf32>,
    %c32 = arith.constant 32 : index
    %c0_17 = arith.constant 0 : index
    %25 = vector.load %arg11[%c32, %c0_17] : memref<72x256xf32, #tpu.memory_space<vmem>>, vector<8x256xf32>
    tpu.vector_store %arg11[%c32, %c0_17], %1 {strides = array<i32>} : memref<72x256xf32, #tpu.memory_space<vmem>>, vector<8x256xf32>,
    %c255_i32 = arith.constant 255 : i32
    %26 = tpu.dynamic_rotate %1 by %c255_i32 dim 1 : vector<8x256xf32>, i32 -> vector<8x256xf32>
    %c5 = arith.constant 5 : index
    %c0_18 = arith.constant 0 : index
    %27 = vector.load %arg9[%c5, %c0_18] : memref<9x256xf32, #tpu.memory_space<vmem>>, vector<1x256xf32>
    %28 = vector.broadcast %27 : vector<1x256xf32> to vector<8x256xf32>
    %29 = arith.mulf %26, %28 : vector<8x256xf32>
    %c40 = arith.constant 40 : index
    %c0_19 = arith.constant 0 : index
    %30 = vector.load %arg11[%c40, %c0_19] : memref<72x256xf32, #tpu.memory_space<vmem>>, vector<8x256xf32>
    tpu.vector_store %arg11[%c40, %c0_19], %29 {strides = array<i32>} : memref<72x256xf32, #tpu.memory_space<vmem>>, vector<8x256xf32>,
    %c241_i32 = arith.constant 241 : i32
    %31 = tpu.dynamic_rotate %1 by %c241_i32 dim 1 : vector<8x256xf32>, i32 -> vector<8x256xf32>
    %c6 = arith.constant 6 : index
    %c0_20 = arith.constant 0 : index
    %32 = vector.load %arg9[%c6, %c0_20] : memref<9x256xf32, #tpu.memory_space<vmem>>, vector<1x256xf32>
    %33 = vector.broadcast %32 : vector<1x256xf32> to vector<8x256xf32>
    %34 = arith.mulf %31, %33 : vector<8x256xf32>
    %c48 = arith.constant 48 : index
    %c0_21 = arith.constant 0 : index
    %35 = vector.load %arg11[%c48, %c0_21] : memref<72x256xf32, #tpu.memory_space<vmem>>, vector<8x256xf32>
    tpu.vector_store %arg11[%c48, %c0_21], %34 {strides = array<i32>} : memref<72x256xf32, #tpu.memory_space<vmem>>, vector<8x256xf32>,
    %c240_i32 = arith.constant 240 : i32
    %36 = tpu.dynamic_rotate %1 by %c240_i32 dim 1 : vector<8x256xf32>, i32 -> vector<8x256xf32>
    %c7 = arith.constant 7 : index
    %c0_22 = arith.constant 0 : index
    %37 = vector.load %arg9[%c7, %c0_22] : memref<9x256xf32, #tpu.memory_space<vmem>>, vector<1x256xf32>
    %38 = vector.broadcast %37 : vector<1x256xf32> to vector<8x256xf32>
    %39 = arith.mulf %36, %38 : vector<8x256xf32>
    %c56 = arith.constant 56 : index
    %c0_23 = arith.constant 0 : index
    %40 = vector.load %arg11[%c56, %c0_23] : memref<72x256xf32, #tpu.memory_space<vmem>>, vector<8x256xf32>
    tpu.vector_store %arg11[%c56, %c0_23], %39 {strides = array<i32>} : memref<72x256xf32, #tpu.memory_space<vmem>>, vector<8x256xf32>,
    %c239_i32 = arith.constant 239 : i32
    %41 = tpu.dynamic_rotate %1 by %c239_i32 dim 1 : vector<8x256xf32>, i32 -> vector<8x256xf32>
    %c8_24 = arith.constant 8 : index
    %c0_25 = arith.constant 0 : index
    %42 = vector.load %arg9[%c8_24, %c0_25] : memref<9x256xf32, #tpu.memory_space<vmem>>, vector<1x256xf32>
    %43 = vector.broadcast %42 : vector<1x256xf32> to vector<8x256xf32>
    %44 = arith.mulf %41, %43 : vector<8x256xf32>
    %c64 = arith.constant 64 : index
    %c0_26 = arith.constant 0 : index
    %45 = vector.load %arg11[%c64, %c0_26] : memref<72x256xf32, #tpu.memory_space<vmem>>, vector<8x256xf32>
    tpu.vector_store %arg11[%c64, %c0_26], %44 {strides = array<i32>} : memref<72x256xf32, #tpu.memory_space<vmem>>, vector<8x256xf32>,
    %c0_27 = arith.constant 0 : index
    %c0_28 = arith.constant 0 : index
    %46 = vector.load %arg11[%c0_27, %c0_28] : memref<72x256xf32, #tpu.memory_space<vmem>>, vector<72x256xf32>
    %47 = arith.truncf %46 : vector<72x256xf32> to vector<72x256xbf16>
    %cst = arith.constant dense<0.000000e+00> : vector<8x256xf32>
    %48 = tpu.matmul %4, %47, %cst {dimension_numbers = #tpu.dot_dimension_numbers<[1], [0], [0], [1], [0, 0, 1, 1], [], []>} : vector<8x72xbf16>, vector<72x256xbf16>, vector<8x256xf32> -> vector<8x256xf32>
    %c0_29 = arith.constant 0 : index
    %c0_30 = arith.constant 0 : index
    %49 = vector.load %arg8[%c0_29, %c0_30] : memref<8x6xf32, #tpu.memory_space<vmem>>, vector<8x1xf32>
    %50 = vector.broadcast %49 : vector<8x1xf32> to vector<8x256xf32>
    %51 = arith.addf %48, %50 : vector<8x256xf32>
    %cst_31 = arith.constant 0.000000e+00 : f32
    %52 = vector.broadcast %cst_31 : f32 to vector<8x256xf32>
    %53 = arith.maximumf %51, %52 : vector<8x256xf32>
    %54 = vector.broadcast %3 : vector<8x1xf32> to vector<8x256xf32>
    %55 = arith.addf %53, %54 : vector<8x256xf32>
    %c0_32 = arith.constant 0 : index
    %c0_33 = arith.constant 0 : index
    %56 = vector.load %arg5[%c0_32, %c0_33] : memref<8x8xbf16, #tpu.memory_space<vmem>>, vector<8x8xbf16>
    %57 = arith.truncf %1 : vector<8x256xf32> to vector<8x256xbf16>
    %cst_34 = arith.constant dense<0.000000e+00> : vector<8x256xf32>
    %58 = tpu.matmul %56, %57, %cst_34 {dimension_numbers = #tpu.dot_dimension_numbers<[1], [0], [0], [1], [0, 0, 1, 1], [], []>} : vector<8x8xbf16>, vector<8x256xbf16>, vector<8x256xf32> -> vector<8x256xf32>
    %c0_35 = arith.constant 0 : index
    %c0_36 = arith.constant 0 : index
    %59 = vector.load %arg4[%c0_35, %c0_36] : memref<8x72xbf16, #tpu.memory_space<vmem>>, vector<8x72xbf16>
    %c17_i32_37 = arith.constant 17 : i32
    %60 = tpu.dynamic_rotate %55 by %c17_i32_37 dim 1 : vector<8x256xf32>, i32 -> vector<8x256xf32>
    %c0_38 = arith.constant 0 : index
    %c0_39 = arith.constant 0 : index
    %61 = vector.load %arg9[%c0_38, %c0_39] : memref<9x256xf32, #tpu.memory_space<vmem>>, vector<1x256xf32>
    %62 = vector.broadcast %61 : vector<1x256xf32> to vector<8x256xf32>
    %63 = arith.mulf %60, %62 : vector<8x256xf32>
    %c0_40 = arith.constant 0 : index
    %c0_41 = arith.constant 0 : index
    %64 = vector.load %arg12[%c0_40, %c0_41] : memref<72x256xf32, #tpu.memory_space<vmem>>, vector<8x256xf32>
    tpu.vector_store %arg12[%c0_40, %c0_41], %63 {strides = array<i32>} : memref<72x256xf32, #tpu.memory_space<vmem>>, vector<8x256xf32>,
    %c16_i32_42 = arith.constant 16 : i32
    %65 = tpu.dynamic_rotate %55 by %c16_i32_42 dim 1 : vector<8x256xf32>, i32 -> vector<8x256xf32>
    %c1_43 = arith.constant 1 : index
    %c0_44 = arith.constant 0 : index
    %66 = vector.load %arg9[%c1_43, %c0_44] : memref<9x256xf32, #tpu.memory_space<vmem>>, vector<1x256xf32>
    %67 = vector.broadcast %66 : vector<1x256xf32> to vector<8x256xf32>
    %68 = arith.mulf %65, %67 : vector<8x256xf32>
    %c8_45 = arith.constant 8 : index
    %c0_46 = arith.constant 0 : index
    %69 = vector.load %arg12[%c8_45, %c0_46] : memref<72x256xf32, #tpu.memory_space<vmem>>, vector<8x256xf32>
    tpu.vector_store %arg12[%c8_45, %c0_46], %68 {strides = array<i32>} : memref<72x256xf32, #tpu.memory_space<vmem>>, vector<8x256xf32>,
    %c15_i32_47 = arith.constant 15 : i32
    %70 = tpu.dynamic_rotate %55 by %c15_i32_47 dim 1 : vector<8x256xf32>, i32 -> vector<8x256xf32>
    %c2_48 = arith.constant 2 : index
    %c0_49 = arith.constant 0 : index
    %71 = vector.load %arg9[%c2_48, %c0_49] : memref<9x256xf32, #tpu.memory_space<vmem>>, vector<1x256xf32>
    %72 = vector.broadcast %71 : vector<1x256xf32> to vector<8x256xf32>
    %73 = arith.mulf %70, %72 : vector<8x256xf32>
    %c16_50 = arith.constant 16 : index
    %c0_51 = arith.constant 0 : index
    %74 = vector.load %arg12[%c16_50, %c0_51] : memref<72x256xf32, #tpu.memory_space<vmem>>, vector<8x256xf32>
    tpu.vector_store %arg12[%c16_50, %c0_51], %73 {strides = array<i32>} : memref<72x256xf32, #tpu.memory_space<vmem>>, vector<8x256xf32>,
    %c1_i32_52 = arith.constant 1 : i32
    %75 = tpu.dynamic_rotate %55 by %c1_i32_52 dim 1 : vector<8x256xf32>, i32 -> vector<8x256xf32>
    %c3_53 = arith.constant 3 : index
    %c0_54 = arith.constant 0 : index
    %76 = vector.load %arg9[%c3_53, %c0_54] : memref<9x256xf32, #tpu.memory_space<vmem>>, vector<1x256xf32>
    %77 = vector.broadcast %76 : vector<1x256xf32> to vector<8x256xf32>
    %78 = arith.mulf %75, %77 : vector<8x256xf32>
    %c24_55 = arith.constant 24 : index
    %c0_56 = arith.constant 0 : index
    %79 = vector.load %arg12[%c24_55, %c0_56] : memref<72x256xf32, #tpu.memory_space<vmem>>, vector<8x256xf32>
    tpu.vector_store %arg12[%c24_55, %c0_56], %78 {strides = array<i32>} : memref<72x256xf32, #tpu.memory_space<vmem>>, vector<8x256xf32>,
    %c32_57 = arith.constant 32 : index
    %c0_58 = arith.constant 0 : index
    %80 = vector.load %arg12[%c32_57, %c0_58] : memref<72x256xf32, #tpu.memory_space<vmem>>, vector<8x256xf32>
    tpu.vector_store %arg12[%c32_57, %c0_58], %55 {strides = array<i32>} : memref<72x256xf32, #tpu.memory_space<vmem>>, vector<8x256xf32>,
    %c255_i32_59 = arith.constant 255 : i32
    %81 = tpu.dynamic_rotate %55 by %c255_i32_59 dim 1 : vector<8x256xf32>, i32 -> vector<8x256xf32>
    %c5_60 = arith.constant 5 : index
    %c0_61 = arith.constant 0 : index
    %82 = vector.load %arg9[%c5_60, %c0_61] : memref<9x256xf32, #tpu.memory_space<vmem>>, vector<1x256xf32>
    %83 = vector.broadcast %82 : vector<1x256xf32> to vector<8x256xf32>
    %84 = arith.mulf %81, %83 : vector<8x256xf32>
    %c40_62 = arith.constant 40 : index
    %c0_63 = arith.constant 0 : index
    %85 = vector.load %arg12[%c40_62, %c0_63] : memref<72x256xf32, #tpu.memory_space<vmem>>, vector<8x256xf32>
    tpu.vector_store %arg12[%c40_62, %c0_63], %84 {strides = array<i32>} : memref<72x256xf32, #tpu.memory_space<vmem>>, vector<8x256xf32>,
    %c241_i32_64 = arith.constant 241 : i32
    %86 = tpu.dynamic_rotate %55 by %c241_i32_64 dim 1 : vector<8x256xf32>, i32 -> vector<8x256xf32>
    %c6_65 = arith.constant 6 : index
    %c0_66 = arith.constant 0 : index
    %87 = vector.load %arg9[%c6_65, %c0_66] : memref<9x256xf32, #tpu.memory_space<vmem>>, vector<1x256xf32>
    %88 = vector.broadcast %87 : vector<1x256xf32> to vector<8x256xf32>
    %89 = arith.mulf %86, %88 : vector<8x256xf32>
    %c48_67 = arith.constant 48 : index
    %c0_68 = arith.constant 0 : index
    %90 = vector.load %arg12[%c48_67, %c0_68] : memref<72x256xf32, #tpu.memory_space<vmem>>, vector<8x256xf32>
    tpu.vector_store %arg12[%c48_67, %c0_68], %89 {strides = array<i32>} : memref<72x256xf32, #tpu.memory_space<vmem>>, vector<8x256xf32>,
    %c240_i32_69 = arith.constant 240 : i32
    %91 = tpu.dynamic_rotate %55 by %c240_i32_69 dim 1 : vector<8x256xf32>, i32 -> vector<8x256xf32>
    %c7_70 = arith.constant 7 : index
    %c0_71 = arith.constant 0 : index
    %92 = vector.load %arg9[%c7_70, %c0_71] : memref<9x256xf32, #tpu.memory_space<vmem>>, vector<1x256xf32>
    %93 = vector.broadcast %92 : vector<1x256xf32> to vector<8x256xf32>
    %94 = arith.mulf %91, %93 : vector<8x256xf32>
    %c56_72 = arith.constant 56 : index
    %c0_73 = arith.constant 0 : index
    %95 = vector.load %arg12[%c56_72, %c0_73] : memref<72x256xf32, #tpu.memory_space<vmem>>, vector<8x256xf32>
    tpu.vector_store %arg12[%c56_72, %c0_73], %94 {strides = array<i32>} : memref<72x256xf32, #tpu.memory_space<vmem>>, vector<8x256xf32>,
    %c239_i32_74 = arith.constant 239 : i32
    %96 = tpu.dynamic_rotate %55 by %c239_i32_74 dim 1 : vector<8x256xf32>, i32 -> vector<8x256xf32>
    %c8_75 = arith.constant 8 : index
    %c0_76 = arith.constant 0 : index
    %97 = vector.load %arg9[%c8_75, %c0_76] : memref<9x256xf32, #tpu.memory_space<vmem>>, vector<1x256xf32>
    %98 = vector.broadcast %97 : vector<1x256xf32> to vector<8x256xf32>
    %99 = arith.mulf %96, %98 : vector<8x256xf32>
    %c64_77 = arith.constant 64 : index
    %c0_78 = arith.constant 0 : index
    %100 = vector.load %arg12[%c64_77, %c0_78] : memref<72x256xf32, #tpu.memory_space<vmem>>, vector<8x256xf32>
    tpu.vector_store %arg12[%c64_77, %c0_78], %99 {strides = array<i32>} : memref<72x256xf32, #tpu.memory_space<vmem>>, vector<8x256xf32>,
    %c0_79 = arith.constant 0 : index
    %c0_80 = arith.constant 0 : index
    %101 = vector.load %arg12[%c0_79, %c0_80] : memref<72x256xf32, #tpu.memory_space<vmem>>, vector<72x256xf32>
    %102 = arith.truncf %101 : vector<72x256xf32> to vector<72x256xbf16>
    %cst_81 = arith.constant dense<0.000000e+00> : vector<8x256xf32>
    %103 = tpu.matmul %59, %102, %cst_81 {dimension_numbers = #tpu.dot_dimension_numbers<[1], [0], [0], [1], [0, 0, 1, 1], [], []>} : vector<8x72xbf16>, vector<72x256xbf16>, vector<8x256xf32> -> vector<8x256xf32>
    %104 = arith.addf %58, %103 : vector<8x256xf32>
    %c0_82 = arith.constant 0 : index
    %c1_83 = arith.constant 1 : index
    %105 = vector.load %arg8[%c0_82, %c1_83] : memref<8x6xf32, #tpu.memory_space<vmem>>, vector<8x1xf32>
    %106 = vector.broadcast %105 : vector<8x1xf32> to vector<8x256xf32>
    %107 = arith.addf %104, %106 : vector<8x256xf32>
    %108 = arith.truncf %107 : vector<8x256xf32> to vector<8x256xbf16>
    %c0_84 = arith.constant 0 : index
    %c0_85 = arith.constant 0 : index
    %109 = vector.load %arg6[%c0_84, %c0_85] : memref<24x8xbf16, #tpu.memory_space<vmem>>, vector<24x8xbf16>
    %cst_86 = arith.constant dense<0.000000e+00> : vector<24x256xf32>
    %110 = tpu.matmul %109, %108, %cst_86 {dimension_numbers = #tpu.dot_dimension_numbers<[1], [0], [0], [1], [0, 0, 1, 1], [], []>} : vector<24x8xbf16>, vector<8x256xbf16>, vector<24x256xf32> -> vector<24x256xf32>
    %111 = vector.extract_strided_slice %110 {offsets = [0, 0], sizes = [8, 256], strides = [1, 1]} : vector<24x256xf32> to vector<8x256xf32>
    %c0_87 = arith.constant 0 : index
    %c2_88 = arith.constant 2 : index
    %112 = vector.load %arg8[%c0_87, %c2_88] : memref<8x6xf32, #tpu.memory_space<vmem>>, vector<8x1xf32>
    %113 = vector.broadcast %112 : vector<8x1xf32> to vector<8x256xf32>
    %114 = arith.addf %111, %113 : vector<8x256xf32>
    %115 = vector.extract_strided_slice %110 {offsets = [8, 0], sizes = [8, 256], strides = [1, 1]} : vector<24x256xf32> to vector<8x256xf32>
    %c0_89 = arith.constant 0 : index
    %c3_90 = arith.constant 3 : index
    %116 = vector.load %arg8[%c0_89, %c3_90] : memref<8x6xf32, #tpu.memory_space<vmem>>, vector<8x1xf32>
    %117 = vector.broadcast %116 : vector<8x1xf32> to vector<8x256xf32>
    %118 = arith.addf %115, %117 : vector<8x256xf32>
    %119 = vector.extract_strided_slice %110 {offsets = [16, 0], sizes = [8, 256], strides = [1, 1]} : vector<24x256xf32> to vector<8x256xf32>
    %c0_91 = arith.constant 0 : index
    %c4 = arith.constant 4 : index
    %120 = vector.load %arg8[%c0_91, %c4] : memref<8x6xf32, #tpu.memory_space<vmem>>, vector<8x1xf32>
    %121 = vector.broadcast %120 : vector<8x1xf32> to vector<8x256xf32>
    %122 = arith.addf %119, %121 : vector<8x256xf32>
    %123 = arith.truncf %114 : vector<8x256xf32> to vector<8x256xbf16>
    %124 = arith.truncf %118 : vector<8x256xf32> to vector<8x256xbf16>
    %cst_92 = arith.constant dense<0.000000e+00> : vector<256x256xf32>
    %125 = tpu.matmul %123, %124, %cst_92 {dimension_numbers = #tpu.dot_dimension_numbers<[0], [0], [1], [1], [0, 1, 1, 1], [], []>} : vector<8x256xbf16>, vector<8x256xbf16>, vector<256x256xf32> -> vector<256x256xf32>
    %cst_93 = arith.constant dense<0xFF800000> : vector<256xf32>
    %126 = vector.multi_reduction <maximumf>, %125, %cst_93 [1] : vector<256x256xf32> to vector<256xf32>
    %127 = vector.shape_cast %126 : vector<256xf32> to vector<256x1xf32>
    %128 = vector.broadcast %127 : vector<256x1xf32> to vector<256x256xf32>
    %129 = arith.subf %125, %128 : vector<256x256xf32>
    %130 = math.exp %129 : vector<256x256xf32>
    %cst_94 = arith.constant dense<0.000000e+00> : vector<256xf32>
    %131 = vector.multi_reduction <add>, %130, %cst_94 [1] : vector<256x256xf32> to vector<256xf32>
    %132 = vector.shape_cast %131 : vector<256xf32> to vector<256x1xf32>
    %133 = tpu.reciprocal %132 {approx = true} : vector<256x1xf32> -> vector<256x1xf32>
    %134 = vector.broadcast %133 : vector<256x1xf32> to vector<256x256xf32>
    %135 = arith.mulf %130, %134 : vector<256x256xf32>
    %136 = arith.truncf %135 : vector<256x256xf32> to vector<256x256xbf16>
    %137 = arith.truncf %122 : vector<8x256xf32> to vector<8x256xbf16>
    %cst_95 = arith.constant dense<0.000000e+00> : vector<256x8xf32>
    %138 = tpu.matmul %136, %137, %cst_95 {dimension_numbers = #tpu.dot_dimension_numbers<[1], [1], [0], [0], [0, 0, 1, 0], [], []>} : vector<256x256xbf16>, vector<8x256xbf16>, vector<256x8xf32> -> vector<256x8xf32>
    %c0_96 = arith.constant 0 : index
    %c0_97 = arith.constant 0 : index
    %139 = vector.load %arg7[%c0_96, %c0_97] : memref<8x8xbf16, #tpu.memory_space<vmem>>, vector<8x8xbf16>
    %140 = arith.truncf %138 : vector<256x8xf32> to vector<256x8xbf16>
    %cst_98 = arith.constant dense<0.000000e+00> : vector<8x256xf32>
    %141 = tpu.matmul %139, %140, %cst_98 {dimension_numbers = #tpu.dot_dimension_numbers<[1], [1], [0], [0], [0, 0, 1, 0], [], []>} : vector<8x8xbf16>, vector<256x8xbf16>, vector<8x256xf32> -> vector<8x256xf32>
    %142 = arith.addf %107, %141 : vector<8x256xf32>
    %c0_99 = arith.constant 0 : index
    %c5_100 = arith.constant 5 : index
    %143 = vector.load %arg8[%c0_99, %c5_100] : memref<8x6xf32, #tpu.memory_space<vmem>>, vector<8x1xf32>
    %144 = vector.broadcast %143 : vector<8x1xf32> to vector<8x256xf32>
    %145 = arith.addf %142, %144 : vector<8x256xf32>
    %c0_101 = arith.constant 0 : index
    %c0_102 = arith.constant 0 : index
    %c0_103 = arith.constant 0 : index
    %146 = vector.load %arg10[%c0_101, %c0_102, %c0_103] : memref<1x8x256xf32, #tpu.memory_space<vmem>>, vector<1x8x256xf32>
    %147 = vector.shape_cast %146 : vector<1x8x256xf32> to vector<8x256xf32>
    %148 = vector.shape_cast %145 : vector<8x256xf32> to vector<1x8x256xf32>
    tpu.vector_store %arg10[%c0_101, %c0_102, %c0_103], %148 {strides = array<i32>} : memref<1x8x256xf32, #tpu.memory_space<vmem>>, vector<1x8x256xf32>,
    return
  }
  func.func @transform_0(%arg0: i32) -> (i32, i32, i32) {
    %c0_i32 = arith.constant 0 : i32
    %c0_i32_0 = arith.constant 0 : i32
    %c0_i32_1 = arith.constant 0 : i32
    return %arg0, %c0_i32, %c0_i32_0 : i32, i32, i32
  }
  func.func @transform_1(%arg0: i32) -> (i32, i32, i32) {
    %c0_i32 = arith.constant 0 : i32
    %c0_i32_0 = arith.constant 0 : i32
    %c0_i32_1 = arith.constant 0 : i32
    return %arg0, %c0_i32, %c0_i32_0 : i32, i32, i32
  }
  func.func @transform_2(%arg0: i32) -> (i32, i32) {
    %c0_i32 = arith.constant 0 : i32
    %c0_i32_0 = arith.constant 0 : i32
    %c0_i32_1 = arith.constant 0 : i32
    return %c0_i32, %c0_i32_0 : i32, i32
  }
  func.func @transform_3(%arg0: i32) -> (i32, i32) {
    %c0_i32 = arith.constant 0 : i32
    %c0_i32_0 = arith.constant 0 : i32
    %c0_i32_1 = arith.constant 0 : i32
    return %c0_i32, %c0_i32_0 : i32, i32
  }
  func.func @transform_4(%arg0: i32) -> (i32, i32) {
    %c0_i32 = arith.constant 0 : i32
    %c0_i32_0 = arith.constant 0 : i32
    %c0_i32_1 = arith.constant 0 : i32
    return %c0_i32, %c0_i32_0 : i32, i32
  }
  func.func @transform_5(%arg0: i32) -> (i32, i32) {
    %c0_i32 = arith.constant 0 : i32
    %c0_i32_0 = arith.constant 0 : i32
    %c0_i32_1 = arith.constant 0 : i32
    return %c0_i32, %c0_i32_0 : i32, i32
  }
  func.func @transform_6(%arg0: i32) -> (i32, i32) {
    %c0_i32 = arith.constant 0 : i32
    %c0_i32_0 = arith.constant 0 : i32
    %c0_i32_1 = arith.constant 0 : i32
    return %c0_i32, %c0_i32_0 : i32, i32
  }
  func.func @transform_7(%arg0: i32) -> (i32, i32) {
    %c0_i32 = arith.constant 0 : i32
    %c0_i32_0 = arith.constant 0 : i32
    %c0_i32_1 = arith.constant 0 : i32
    return %c0_i32, %c0_i32_0 : i32, i32
  }
  func.func @transform_8(%arg0: i32) -> (i32, i32) {
    %c0_i32 = arith.constant 0 : i32
    %c0_i32_0 = arith.constant 0 : i32
    %c0_i32_1 = arith.constant 0 : i32
    return %c0_i32, %c0_i32_0 : i32, i32
  }
  func.func @transform_9(%arg0: i32) -> (i32, i32, i32) {
    %c0_i32 = arith.constant 0 : i32
    %c0_i32_0 = arith.constant 0 : i32
    %c0_i32_1 = arith.constant 0 : i32
    return %arg0, %c0_i32, %c0_i32_0 : i32, i32, i32
  }
}

</mosaic_0001>

<llo_original>
// kernel: forward_pallas.1
$region0: #{forward_pallas.1}
  #allocation0 [shape = 'u32[]', space=smem, size = 0x4, offset = 0x4, fixed_abs, tag = 'smem constant byte address 0x4 - core index']
  #allocation1 [shape = 'u32[144,128]{1,0:T(1,128)}', space=vmem, size = 0x12000, scoped, tag = 'internal scratch']
  #allocation2 [shape = 'f32[72,256]{1,0:T(8,128)}', space=vmem, size = 0x12000, scoped, tag = 'scratch operand']
  #allocation3 [shape = 'f32[72,256]{1,0:T(8,128)}', space=vmem, size = 0x12000, scoped, tag = 'scratch operand']
  %s0 = inlined_call_operand.vmem [shape: f32[2,8,256], index: 0, kind: input, shape index: {}]
  %s1 = inlined_call_operand.vmem [shape: f32[2,8,1], index: 1, kind: input, shape index: {}]
  %s2 = inlined_call_operand.vmem [shape: bf16[8,72], index: 2, kind: input, shape index: {}]
  %s3 = inlined_call_operand.vmem [shape: bf16[8,72], index: 3, kind: input, shape index: {}]
  %s4 = inlined_call_operand.vmem [shape: bf16[8,8], index: 4, kind: input, shape index: {}]
  %s5 = inlined_call_operand.vmem [shape: bf16[24,8], index: 5, kind: input, shape index: {}]
  %s6 = inlined_call_operand.vmem [shape: bf16[8,8], index: 6, kind: input, shape index: {}]
  %s7 = inlined_call_operand.vmem [shape: f32[8,6], index: 7, kind: input, shape index: {}]
  %s8 = inlined_call_operand.vmem [shape: f32[9,256], index: 8, kind: input, shape index: {}]
  %s9 = inlined_call_operand.vmem [shape: f32[2,8,256], index: 9, kind: output, shape index: {}]
  %s10 = sld [smem:[#allocation0]]
  $region69: #{forward_pallas.1} parent=0
    _
  %s12 = ssub.s32 1, %s10
  %s13 = scalar_select 0, %s12, %s10
  loop: start=0, step=1, limit=4
  $region2: #{forward_pallas.1} parent=0 // loop_pre_header
    _
  $region3: #{forward_pallas.1} parent=0 // loop_header
    %s15 = sphi 0, %s19
    %p16 = scmp.ge.s32.totalorder %s15, 4
    %s25 = sphi 0, %s27
    %s28 = sphi 0, %s25
    %s29 = sphi 0, %s28
    %s45 = sphi 0, %s29
    %s51 = sphi 0, %s53
    %s54 = sphi 0, %s51
    %s55 = sphi 0, %s54
    %s71 = sphi 0, %s55
    %s75 = sphi 0, %s75
    %s77 = sphi 0, %s75
    %s78 = sphi 0, %s77
    %s92 = sphi 0, %s78
    %s96 = sphi 0, %s96
    %s98 = sphi 0, %s96
    %s99 = sphi 0, %s98
    %s113 = sphi 0, %s99
    %s117 = sphi 0, %s117
    %s119 = sphi 0, %s117
    %s120 = sphi 0, %s119
    %s134 = sphi 0, %s120
    %s138 = sphi 0, %s138
    %s140 = sphi 0, %s138
    %s141 = sphi 0, %s140
    %s155 = sphi 0, %s141
    %s159 = sphi 0, %s159
    %s161 = sphi 0, %s159
    %s162 = sphi 0, %s161
    %s176 = sphi 0, %s162
    %s180 = sphi 0, %s180
    %s182 = sphi 0, %s180
    %s183 = sphi 0, %s182
    %s197 = sphi 0, %s183
    %s201 = sphi 0, %s201
    %s203 = sphi 0, %s201
    %s204 = sphi 0, %s203
    %s218 = sphi 0, %s204
    %s224 = sphi 0, %s226
    %s227 = sphi 0, %s224
    %s228 = sphi 0, %s227
    %s244 = sphi 0, %s228
  $region4: #{forward_pallas.1} parent=0 // loop_header_branch
    %18 = sbr.rel (%p16) target = $region8
  $region5: #{forward_pallas.1} parent=0 // loop_body
    %s20 = ssub.s32 %s15, 1
    %s21 = ssub.s32 %s15, 2
    %s22 = sadd.s32 %s15, 1
    %s23 = ssub.s32 %s15, %s22
    %p24 = scmp.eq.s32.totalorder %s23, 0
    %s26 = sadd.s32 %s25, 1
    %s27 = scalar_select %p24, %s25, %s26
    %p30 = pneg %p24
    %p31 = scmp.eq.s32.totalorder %s15, 1
    %p32 = por %p30, %p31
    %p33 = scmp.ne.s32.totalorder %s25, %s28
    %p34 = scmp.eq.s32.totalorder %s15, 0
    %p35 = por %p33, %p34
    %p36 = scmp.ne.s32.totalorder %s25, %s28
    %p37 = scmp.eq.s32.totalorder %s20, 1
    %p38 = por %p36, %p37
    %p39 = scmp.ne.s32.totalorder %s28, %s29
    %p40 = scmp.eq.s32.totalorder %s20, 0
    %p41 = por %p39, %p40
    %p42 = scmp.ne.s32.totalorder %s28, %s29
    %p43 = scmp.eq.s32.totalorder %s21, 1
    %p44 = por %p42, %p43
    %p46 = scmp.ne.s32.totalorder %s29, %s45
    %p47 = scmp.eq.s32.totalorder %s21, 0
    %p48 = por %p46, %p47
    %s49 = ssub.s32 %s15, %s22
    %p50 = scmp.eq.s32.totalorder %s49, 0
    %s52 = sadd.s32 %s51, 1
    %s53 = scalar_select %p50, %s51, %s52
    %p56 = pneg %p50
    %p57 = scmp.eq.s32.totalorder %s15, 1
    %p58 = por %p56, %p57
    %p59 = scmp.ne.s32.totalorder %s51, %s54
    %p60 = scmp.eq.s32.totalorder %s15, 0
    %p61 = por %p59, %p60
    %p62 = scmp.ne.s32.totalorder %s51, %s54
    %p63 = scmp.eq.s32.totalorder %s20, 1
    %p64 = por %p62, %p63
    %p65 = scmp.ne.s32.totalorder %s54, %s55
    %p66 = scmp.eq.s32.totalorder %s20, 0
    %p67 = por %p65, %p66
    %p68 = scmp.ne.s32.totalorder %s54, %s55
    %p69 = scmp.eq.s32.totalorder %s21, 1
    %p70 = por %p68, %p69
    %p72 = scmp.ne.s32.totalorder %s55, %s71
    %p73 = scmp.eq.s32.totalorder %s21, 0
    %p74 = por %p72, %p73
    %s76 = sadd.s32 %s75, 1
    %p79 = scmp.eq.s32.totalorder %s15, 1
    %p80 = scmp.ne.s32.totalorder %s75, %s77
    %p81 = scmp.eq.s32.totalorder %s15, 0
    %p82 = por %p80, %p81
    %p83 = scmp.ne.s32.totalorder %s75, %s77
    %p84 = scmp.eq.s32.totalorder %s20, 1
    %p85 = por %p83, %p84
    %p86 = scmp.ne.s32.totalorder %s77, %s78
    %p87 = scmp.eq.s32.totalorder %s20, 0
    %p88 = por %p86, %p87
    %p89 = scmp.ne.s32.totalorder %s77, %s78
    %p90 = scmp.eq.s32.totalorder %s21, 1
    %p91 = por %p89, %p90
    %p93 = scmp.ne.s32.totalorder %s78, %s92
    %p94 = scmp.eq.s32.totalorder %s21, 0
    %p95 = por %p93, %p94
    %s97 = sadd.s32 %s96, 1
    %p100 = scmp.eq.s32.totalorder %s15, 1
    %p101 = scmp.ne.s32.totalorder %s96, %s98
    %p102 = scmp.eq.s32.totalorder %s15, 0
    %p103 = por %p101, %p102
    %p104 = scmp.ne.s32.totalorder %s96, %s98
    %p105 = scmp.eq.s32.totalorder %s20, 1
    %p106 = por %p104, %p105
    %p107 = scmp.ne.s32.totalorder %s98, %s99
    %p108 = scmp.eq.s32.totalorder %s20, 0
    %p109 = por %p107, %p108
    %p110 = scmp.ne.s32.totalorder %s98, %s99
    %p111 = scmp.eq.s32.totalorder %s21, 1
    %p112 = por %p110, %p111
    %p114 = scmp.ne.s32.totalorder %s99, %s113
    %p115 = scmp.eq.s32.totalorder %s21, 0
    %p116 = por %p114, %p115
    %s118 = sadd.s32 %s117, 1
    %p121 = scmp.eq.s32.totalorder %s15, 1
    %p122 = scmp.ne.s32.totalorder %s117, %s119
    %p123 = scmp.eq.s32.totalorder %s15, 0
    %p124 = por %p122, %p123
    %p125 = scmp.ne.s32.totalorder %s117, %s119
    %p126 = scmp.eq.s32.totalorder %s20, 1
    %p127 = por %p125, %p126
    %p128 = scmp.ne.s32.totalorder %s119, %s120
    %p129 = scmp.eq.s32.totalorder %s20, 0
    %p130 = por %p128, %p129
    %p131 = scmp.ne.s32.totalorder %s119, %s120
    %p132 = scmp.eq.s32.totalorder %s21, 1
    %p133 = por %p131, %p132
    %p135 = scmp.ne.s32.totalorder %s120, %s134
    %p136 = scmp.eq.s32.totalorder %s21, 0
    %p137 = por %p135, %p136
    %s139 = sadd.s32 %s138, 1
    %p142 = scmp.eq.s32.totalorder %s15, 1
    %p143 = scmp.ne.s32.totalorder %s138, %s140
    %p144 = scmp.eq.s32.totalorder %s15, 0
    %p145 = por %p143, %p144
    %p146 = scmp.ne.s32.totalorder %s138, %s140
    %p147 = scmp.eq.s32.totalorder %s20, 1
    %p148 = por %p146, %p147
    %p149 = scmp.ne.s32.totalorder %s140, %s141
    %p150 = scmp.eq.s32.totalorder %s20, 0
    %p151 = por %p149, %p150
    %p152 = scmp.ne.s32.totalorder %s140, %s141
    %p153 = scmp.eq.s32.totalorder %s21, 1
    %p154 = por %p152, %p153
    %p156 = scmp.ne.s32.totalorder %s141, %s155
    %p157 = scmp.eq.s32.totalorder %s21, 0
    %p158 = por %p156, %p157
    %s160 = sadd.s32 %s159, 1
    %p163 = scmp.eq.s32.totalorder %s15, 1
    %p164 = scmp.ne.s32.totalorder %s159, %s161
    %p165 = scmp.eq.s32.totalorder %s15, 0
    %p166 = por %p164, %p165
    %p167 = scmp.ne.s32.totalorder %s159, %s161
    %p168 = scmp.eq.s32.totalorder %s20, 1
    %p169 = por %p167, %p168
    %p170 = scmp.ne.s32.totalorder %s161, %s162
    %p171 = scmp.eq.s32.totalorder %s20, 0
    %p172 = por %p170, %p171
    %p173 = scmp.ne.s32.totalorder %s161, %s162
    %p174 = scmp.eq.s32.totalorder %s21, 1
    %p175 = por %p173, %p174
    %p177 = scmp.ne.s32.totalorder %s162, %s176
    %p178 = scmp.eq.s32.totalorder %s21, 0
    %p179 = por %p177, %p178
    %s181 = sadd.s32 %s180, 1
    %p184 = scmp.eq.s32.totalorder %s15, 1
    %p185 = scmp.ne.s32.totalorder %s180, %s182
    %p186 = scmp.eq.s32.totalorder %s15, 0
    %p187 = por %p185, %p186
    %p188 = scmp.ne.s32.totalorder %s180, %s182
    %p189 = scmp.eq.s32.totalorder %s20, 1
    %p190 = por %p188, %p189
    %p191 = scmp.ne.s32.totalorder %s182, %s183
    %p192 = scmp.eq.s32.totalorder %s20, 0
    %p193 = por %p191, %p192
    %p194 = scmp.ne.s32.totalorder %s182, %s183
    %p195 = scmp.eq.s32.totalorder %s21, 1
    %p196 = por %p194, %p195
    %p198 = scmp.ne.s32.totalorder %s183, %s197
    %p199 = scmp.eq.s32.totalorder %s21, 0
    %p200 = por %p198, %p199
    %s202 = sadd.s32 %s201, 1
    %p205 = scmp.eq.s32.totalorder %s15, 1
    %p206 = scmp.ne.s32.totalorder %s201, %s203
    %p207 = scmp.eq.s32.totalorder %s15, 0
    %p208 = por %p206, %p207
    %p209 = scmp.ne.s32.totalorder %s201, %s203
    %p210 = scmp.eq.s32.totalorder %s20, 1
    %p211 = por %p209, %p210
    %p212 = scmp.ne.s32.totalorder %s203, %s204
    %p213 = scmp.eq.s32.totalorder %s20, 0
    %p214 = por %p212, %p213
    %p215 = scmp.ne.s32.totalorder %s203, %s204
    %p216 = scmp.eq.s32.totalorder %s21, 1
    %p217 = por %p215, %p216
    %p219 = scmp.ne.s32.totalorder %s204, %s218
    %p220 = scmp.eq.s32.totalorder %s21, 0
    %p221 = por %p219, %p220
    %s222 = ssub.s32 %s15, %s22
    %p223 = scmp.eq.s32.totalorder %s222, 0
    %s225 = sadd.s32 %s224, 1
    %s226 = scalar_select %p223, %s224, %s225
    %p229 = pneg %p223
    %p230 = scmp.eq.s32.totalorder %s15, 1
    %p231 = por %p229, %p230
    %p232 = scmp.ne.s32.totalorder %s224, %s227
    %p233 = scmp.eq.s32.totalorder %s15, 0
    %p234 = por %p232, %p233
    %p235 = scmp.ne.s32.totalorder %s224, %s227
    %p236 = scmp.eq.s32.totalorder %s20, 1
    %p237 = por %p235, %p236
    %p238 = scmp.ne.s32.totalorder %s227, %s228
    %p239 = scmp.eq.s32.totalorder %s20, 0
    %p240 = por %p238, %p239
    %p241 = scmp.ne.s32.totalorder %s227, %s228
    %p242 = scmp.eq.s32.totalorder %s21, 1
    %p243 = por %p241, %p242
    %p245 = scmp.ne.s32.totalorder %s228, %s244
    %p246 = scmp.eq.s32.totalorder %s21, 0
    %p247 = por %p245, %p246
    %p248 = scmp.le.s32.totalorder 1, %s15
    %p249 = scmp.lt.s32.totalorder %s15, 3
    %p250 = pnand %p248, %p249
    %p251 = pneg %p250
    // Predicated region
    $region9: #{forward_pallas.1} parent=5 // pred_check
      _
    $region10: #{forward_pallas.1} parent=5 // pred_check_branch
      %253 = sbr.rel (%p250) target = $region12
    $region11: #{forward_pallas.1} parent=5 // pred_region
      %s254 = ssub.s32 %s15, 1
      // Predicated region
      $region13: #{forward_pallas.1} parent=11 // pred_check
        %p255 = pneg %p88
      $region14: #{forward_pallas.1} parent=11 // pred_check_branch
        %257 = sbr.rel (%p255) target = $region16
      $region15: #{forward_pallas.1} parent=11 // pred_region
        _
      $region16: #{forward_pallas.1} parent=11 // pred_fallthru
        _
      // Predicated region
      $region17: #{forward_pallas.1} parent=11 // pred_check
        %p258 = pneg %p109
      $region18: #{forward_pallas.1} parent=11 // pred_check_branch
        %260 = sbr.rel (%p258) target = $region20
      $region19: #{forward_pallas.1} parent=11 // pred_region
        _
      $region20: #{forward_pallas.1} parent=11 // pred_fallthru
        _
      // Predicated region
      $region21: #{forward_pallas.1} parent=11 // pred_check
        %p261 = pneg %p130
      $region22: #{forward_pallas.1} parent=11 // pred_check_branch
        %263 = sbr.rel (%p261) target = $region24
      $region23: #{forward_pallas.1} parent=11 // pred_region
        _
      $region24: #{forward_pallas.1} parent=11 // pred_fallthru
        _
      // Predicated region
      $region25: #{forward_pallas.1} parent=11 // pred_check
        %p264 = pneg %p151
      $region26: #{forward_pallas.1} parent=11 // pred_check_branch
        %266 = sbr.rel (%p264) target = $region28
      $region27: #{forward_pallas.1} parent=11 // pred_region
        _
      $region28: #{forward_pallas.1} parent=11 // pred_fallthru
        _
      // Predicated region
      $region29: #{forward_pallas.1} parent=11 // pred_check
        %p267 = pneg %p172
      $region30: #{forward_pallas.1} parent=11 // pred_check_branch
        %269 = sbr.rel (%p267) target = $region32
      $region31: #{forward_pallas.1} parent=11 // pred_region
        _
      $region32: #{forward_pallas.1} parent=11 // pred_fallthru
        _
      // Predicated region
      $region33: #{forward_pallas.1} parent=11 // pred_check
        %p270 = pneg %p193
      $region34: #{forward_pallas.1} parent=11 // pred_check_branch
        %272 = sbr.rel (%p270) target = $region36
      $region35: #{forward_pallas.1} parent=11 // pred_region
        _
      $region36: #{forward_pallas.1} parent=11 // pred_fallthru
        _
      // Predicated region
      $region37: #{forward_pallas.1} parent=11 // pred_check
        %p273 = pneg %p214
      $region38: #{forward_pallas.1} parent=11 // pred_check_branch
        %275 = sbr.rel (%p273) target = $region40
      $region39: #{forward_pallas.1} parent=11 // pred_region
        _
      $region40: #{forward_pallas.1} parent=11 // pred_fallthru
        _
    $region12: #{forward_pallas.1} parent=5 // pred_fallthru
      _
    %p276 = scmp.lt.s32.totalorder %s15, 2
    // Predicated region
    $region41: #{forward_pallas.1} parent=5 // pred_check
      %p277 = pneg %p276
    $region42: #{forward_pallas.1} parent=5 // pred_check_branch
      %279 = sbr.rel (%p277) target = $region44
    $region43: #{forward_pallas.1} parent=5 // pred_region
      // Predicated region
      $region45: #{forward_pallas.1} parent=43 // pred_check
        %p280 = pneg %p35
      $region46: #{forward_pallas.1} parent=43 // pred_check_branch
        %282 = sbr.rel (%p280) target = $region48
      $region47: #{forward_pallas.1} parent=43 // pred_region
        %p283 = scmp.lt.s32.totalorder %s15, 1
        %s284 = scalar_select %p283, %s15, 1
        %s285 = smul.addr %s284, 2
        %s286 = smul.addr %s285, 8
        %s287 = scalar_lea.vmem %s0, %s286
      $region48: #{forward_pallas.1} parent=43 // pred_fallthru
        _
      // Predicated region
      $region49: #{forward_pallas.1} parent=43 // pred_check
        %p288 = pneg %p61
      $region50: #{forward_pallas.1} parent=43 // pred_check_branch
        %290 = sbr.rel (%p288) target = $region52
      $region51: #{forward_pallas.1} parent=43 // pred_region
        %p291 = scmp.lt.s32.totalorder %s15, 1
        %s292 = scalar_select %p291, %s15, 1
        %s293 = smul.addr %s292, 8
        %s294 = scalar_lea.vmem %s1, %s293
      $region52: #{forward_pallas.1} parent=43 // pred_fallthru
        _
    $region44: #{forward_pallas.1} parent=5 // pred_fallthru
      _
    %p295 = scmp.le.s32.totalorder 1, %s15
    %p296 = scmp.lt.s32.totalorder %s15, 3
    %p297 = pnand %p295, %p296
    %p298 = pneg %p297
    // Predicated region
    $region53: #{forward_pallas.1} parent=5 // pred_check
      _
    $region54: #{forward_pallas.1} parent=5 // pred_check_branch
      %300 = sbr.rel (%p297) target = $region56
    $region55: #{forward_pallas.1} parent=5 // pred_region
      %s301 = ssub.s32 %s15, 1
      %p302 = scmp.lt.s32.totalorder %s20, 1
      %s303 = scalar_select %p302, %s20, 1
      %s304 = smul.addr %s303, 2
      %s305 = smul.addr %s304, 8
      %s306 = scalar_lea.vmem %s0, %s305
      %p307 = pneg %p41
      %p308 = pneg %p38
      %p309 = scmp.lt.s32.totalorder %s20, 1
      %s310 = scalar_select %p309, %s20, 1
      %s311 = smul.addr %s310, 8
      %s312 = scalar_lea.vmem %s1, %s311
      %p313 = pneg %p67
      %p314 = pneg %p64
      %p315 = pneg %p88
      %p316 = pneg %p85
      %p317 = pneg %p109
      %p318 = pneg %p106
      %p319 = pneg %p130
      %p320 = pneg %p127
      %p321 = pneg %p151
      %p322 = pneg %p148
      %p323 = pneg %p172
      %p324 = pneg %p169
      %p325 = pneg %p193
      %p326 = pneg %p190
      %p327 = pneg %p214
      %p328 = pneg %p211
      %p329 = pneg %p240
      %p330 = pneg %p237
      %p331 = scmp.lt.s32.totalorder %s20, 1
      %s332 = scalar_select %p331, %s20, 1
      %s333 = smul.addr %s332, 2
      %s334 = smul.addr %s333, 8
      %s335 = scalar_lea.vmem %s9, %s334
      %p336 = scmp.lt.s32.totalorder %s20, 1
      %s337 = scalar_select %p336, %s20, 1
      %s338 = smul.addr %s337, 2
      %s339 = smul.addr %s338, 8
      %s340 = scalar_lea.vmem %s0, %s339
      %p341 = scmp.lt.s32.totalorder %s20, 1
      %s342 = scalar_select %p341, %s20, 1
      %s343 = smul.addr %s342, 8
      %s344 = scalar_lea.vmem %s1, %s343
      %p345 = scmp.lt.s32.totalorder %s20, 1
      %s346 = scalar_select %p345, %s20, 1
      %s347 = smul.addr %s346, 2
      %s348 = smul.addr %s347, 8
      %s349 = scalar_lea.vmem %s9, %s348
      %v351 = vld [vmem:[%s340] sm:$0xff]
      %v352 = vld [vmem:[%s340 + $0x8] sm:$0xff]
      %v353 = vld [vmem:[%s344] sm:$0xff]
      %v354 = vld [vmem:[%s2] sm:$0xf]
      %355 = vrot.lane.b32.xlu0 %v351, 17
      %v356 = vpop.permute.xlu0 %355
      %357 = vrot.lane.b32.xlu0 %v352, 17
      %v358 = vpop.permute.xlu0 %357
      %v359 = vlaneseq
      %v360 = vand.u32 %v359, 127
      %vm361 = vcmp.lt.s32.totalorder %v360, 17
      %v362 = vsel %vm361, %v356, %v358
      %v363 = vsel %vm361, %v358, %v356
      %v364 = vld [vmem:[%s8] ss:$8 sm:$0x3]
      %v366 = vlaneseq
      %v367 = vshrl.u32 %v366, 7
      %v368 = vsub.s32 0, %v367
      %v369 = vrot.slane %v364, %v368
      %v370 = vlaneseq
      %v371 = vshrl.u32 %v370, 7
      %v372 = vsub.s32 1, %v371
      %v373 = vrot.slane %v364, %v372
      %v376 = vmul.f32 %v363, %v369
      %v377 = vmul.f32 %v362, %v373
      %378 = vst [vmem:[#allocation2] sm:$0xff] %v376
      %379 = vst [vmem:[#allocation2 + $0x8] sm:$0xff] %v377
      %380 = vrot.lane.b32.xlu0 %v351, 16
      %v381 = vpop.permute.xlu0 %380
      %382 = vrot.lane.b32.xlu0 %v352, 16
      %v383 = vpop.permute.xlu0 %382
      %vm384 = vcmp.lt.s32.totalorder %v360, 16
      %v385 = vsel %vm384, %v381, %v383
      %v386 = vsel %vm384, %v383, %v381
      %s387 = scalar_lea.vmem %s8, 1
      %v388 = vld [vmem:[%s387] ss:$8 sm:$0x3]
      %v390 = vlaneseq
      %v391 = vshrl.u32 %v390, 7
      %v392 = vsub.s32 0, %v391
      %v393 = vrot.slane %v388, %v392
      %v394 = vlaneseq
      %v395 = vshrl.u32 %v394, 7
      %v396 = vsub.s32 1, %v395
      %v397 = vrot.slane %v388, %v396
      %v400 = vmul.f32 %v386, %v393
      %v401 = vmul.f32 %v385, %v397
      %402 = vst [vmem:[#allocation2 + $0x10] sm:$0xff] %v400
      %403 = vst [vmem:[#allocation2 + $0x18] sm:$0xff] %v401
      %404 = vrot.lane.b32.xlu0 %v351, 15
      %v405 = vpop.permute.xlu0 %404
      %406 = vrot.lane.b32.xlu0 %v352, 15
      %v407 = vpop.permute.xlu0 %406
      %vm408 = vcmp.lt.s32.totalorder %v360, 15
      %v409 = vsel %vm408, %v405, %v407
      %v410 = vsel %vm408, %v407, %v405
      %s411 = scalar_lea.vmem %s8, 2
      %v412 = vld [vmem:[%s411] ss:$8 sm:$0x3]
      %v414 = vlaneseq
      %v415 = vshrl.u32 %v414, 7
      %v416 = vsub.s32 0, %v415
      %v417 = vrot.slane %v412, %v416
      %v418 = vlaneseq
      %v419 = vshrl.u32 %v418, 7
      %v420 = vsub.s32 1, %v419
      %v421 = vrot.slane %v412, %v420
      %v424 = vmul.f32 %v410, %v417
      %v425 = vmul.f32 %v409, %v421
      %426 = vst [vmem:[#allocation2 + $0x20] sm:$0xff] %v424
      %427 = vst [vmem:[#allocation2 + $0x28] sm:$0xff] %v425
      %428 = vrot.lane.b32.xlu0 %v351, 1
      %v429 = vpop.permute.xlu0 %428
      %430 = vrot.lane.b32.xlu0 %v352, 1
      %v431 = vpop.permute.xlu0 %430
      %vm432 = vcmp.lt.s32.totalorder %v360, 1
      %v433 = vsel %vm432, %v429, %v431
      %v434 = vsel %vm432, %v431, %v429
      %s435 = scalar_lea.vmem %s8, 3
      %v436 = vld [vmem:[%s435] ss:$8 sm:$0x3]
      %v438 = vlaneseq
      %v439 = vshrl.u32 %v438, 7
      %v440 = vsub.s32 0, %v439
      %v441 = vrot.slane %v436, %v440
      %v442 = vlaneseq
      %v443 = vshrl.u32 %v442, 7
      %v444 = vsub.s32 1, %v443
      %v445 = vrot.slane %v436, %v444
      %v448 = vmul.f32 %v434, %v441
      %v449 = vmul.f32 %v433, %v445
      %450 = vst [vmem:[#allocation2 + $0x30] sm:$0xff] %v448
      %451 = vst [vmem:[#allocation2 + $0x38] sm:$0xff] %v449
      %452 = vst [vmem:[#allocation2 + $0x40] sm:$0xff] %v351
      %453 = vst [vmem:[#allocation2 + $0x48] sm:$0xff] %v352
      %454 = vrot.lane.b32.xlu0 %v351, 127
      %v455 = vpop.permute.xlu0 %454
      %456 = vrot.lane.b32.xlu0 %v352, 127
      %v457 = vpop.permute.xlu0 %456
      %vm458 = vcmp.lt.s32.totalorder %v360, 127
      %v459 = vsel %vm458, %v455, %v457
      %v460 = vsel %vm458, %v457, %v455
      %s461 = scalar_lea.vmem %s8, 5
      %v462 = vld [vmem:[%s461] ss:$8 sm:$0x3]
      %v464 = vlaneseq
      %v465 = vshrl.u32 %v464, 7
      %v466 = vsub.s32 0, %v465
      %v467 = vrot.slane %v462, %v466
      %v468 = vlaneseq
      %v469 = vshrl.u32 %v468, 7
      %v470 = vsub.s32 1, %v469
      %v471 = vrot.slane %v462, %v470
      %v474 = vmul.f32 %v459, %v467
      %v475 = vmul.f32 %v460, %v471
      %476 = vst [vmem:[#allocation2 + $0x50] sm:$0xff] %v474
      %477 = vst [vmem:[#allocation2 + $0x58] sm:$0xff] %v475
      %478 = vrot.lane.b32.xlu0 %v351, 113
      %v479 = vpop.permute.xlu0 %478
      %480 = vrot.lane.b32.xlu0 %v352, 113
      %v481 = vpop.permute.xlu0 %480
      %vm482 = vcmp.lt.s32.totalorder %v360, 113
      %v483 = vsel %vm482, %v479, %v481
      %v484 = vsel %vm482, %v481, %v479
      %s485 = scalar_lea.vmem %s8, 6
      %v486 = vld [vmem:[%s485] ss:$8 sm:$0x3]
      %v488 = vlaneseq
      %v489 = vshrl.u32 %v488, 7
      %v490 = vsub.s32 0, %v489
      %v491 = vrot.slane %v486, %v490
      %v492 = vlaneseq
      %v493 = vshrl.u32 %v492, 7
      %v494 = vsub.s32 1, %v493
      %v495 = vrot.slane %v486, %v494
      %v498 = vmul.f32 %v483, %v491
      %v499 = vmul.f32 %v484, %v495
      %500 = vst [vmem:[#allocation2 + $0x60] sm:$0xff] %v498
      %501 = vst [vmem:[#allocation2 + $0x68] sm:$0xff] %v499
      %502 = vrot.lane.b32.xlu0 %v351, 112
      %v503 = vpop.permute.xlu0 %502
      %504 = vrot.lane.b32.xlu0 %v352, 112
      %v505 = vpop.permute.xlu0 %504
      %vm506 = vcmp.lt.s32.totalorder %v360, 112
      %v507 = vsel %vm506, %v503, %v505
      %v508 = vsel %vm506, %v505, %v503
      %s509 = scalar_lea.vmem %s8, 7
      %v510 = vld [vmem:[%s509] ss:$8 sm:$0x3]
      %v512 = vlaneseq
      %v513 = vshrl.u32 %v512, 7
      %v514 = vsub.s32 0, %v513
      %v515 = vrot.slane %v510, %v514
      %v516 = vlaneseq
      %v517 = vshrl.u32 %v516, 7
      %v518 = vsub.s32 1, %v517
      %v519 = vrot.slane %v510, %v518
      %v522 = vmul.f32 %v507, %v515
      %v523 = vmul.f32 %v508, %v519
      %524 = vst [vmem:[#allocation2 + $0x70] sm:$0xff] %v522
      %525 = vst [vmem:[#allocation2 + $0x78] sm:$0xff] %v523
      %526 = vrot.lane.b32.xlu0 %v351, 111
      %v527 = vpop.permute.xlu0 %526
      %528 = vrot.lane.b32.xlu0 %v352, 111
      %v529 = vpop.permute.xlu0 %528
      %vm530 = vcmp.lt.s32.totalorder %v360, 111
      %v531 = vsel %vm530, %v527, %v529
      %v532 = vsel %vm530, %v529, %v527
      %s533 = scalar_lea.vmem %s8, 16
      %v534 = vld [vmem:[%s533] ss:$8 sm:$0x3]
      %v536 = vlaneseq
      %v537 = vshrl.u32 %v536, 7
      %v538 = vsub.s32 0, %v537
      %v539 = vrot.slane %v534, %v538
      %v540 = vlaneseq
      %v541 = vshrl.u32 %v540, 7
      %v542 = vsub.s32 1, %v541
      %v543 = vrot.slane %v534, %v542
      %v546 = vmul.f32 %v531, %v539
      %v547 = vmul.f32 %v532, %v543
      %548 = vst [vmem:[#allocation2 + $0x80] sm:$0xff] %v546
      %549 = vst [vmem:[#allocation2 + $0x88] sm:$0xff] %v547
      %v550 = vld [vmem:[#allocation2] sm:$0xff]
      %v551 = vld [vmem:[#allocation2 + $0x8] sm:$0xff]
      %v552 = vld [vmem:[#allocation2 + $0x10] sm:$0xff]
      %v553 = vld [vmem:[#allocation2 + $0x18] sm:$0xff]
      %v554 = vld [vmem:[#allocation2 + $0x20] sm:$0xff]
      %v555 = vld [vmem:[#allocation2 + $0x28] sm:$0xff]
      %v556 = vld [vmem:[#allocation2 + $0x30] sm:$0xff]
      %v557 = vld [vmem:[#allocation2 + $0x38] sm:$0xff]
      %v558 = vld [vmem:[#allocation2 + $0x40] sm:$0xff]
      %v559 = vld [vmem:[#allocation2 + $0x48] sm:$0xff]
      %v560 = vld [vmem:[#allocation2 + $0x50] sm:$0xff]
      %v561 = vld [vmem:[#allocation2 + $0x58] sm:$0xff]
      %v562 = vld [vmem:[#allocation2 + $0x60] sm:$0xff]
      %v563 = vld [vmem:[#allocation2 + $0x68] sm:$0xff]
      %v564 = vld [vmem:[#allocation2 + $0x70] sm:$0xff]
      %v565 = vld [vmem:[#allocation2 + $0x78] sm:$0xff]
      %v566 = vld [vmem:[#allocation2 + $0x80] sm:$0xff]
      %v567 = vld [vmem:[#allocation2 + $0x88] sm:$0xff]
      %v568 = vpack.c.bf16 %v552, %v550
      %v569 = vpack.c.bf16 %v553, %v551
      %v570 = vpack.c.bf16 %v556, %v554
      %v571 = vpack.c.bf16 %v557, %v555
      %v572 = vpack.c.bf16 %v560, %v558
      %v573 = vpack.c.bf16 %v561, %v559
      %v574 = vpack.c.bf16 %v564, %v562
      %v575 = vpack.c.bf16 %v565, %v563
      %v576 = vpack.c.bf16 %v566, %v566
      %v577 = vpack.c.bf16 %v567, %v567
      %v578 = vld [vmem:[%s7] sm:$0xff]
      %580 = vset.pattern.permute.xlu0 0
      %581 = vperm.xlu0 %580, %v578
      %v582 = vpop.permute.xlu0 %581
      %vm584 = vcmask 588800
      %v586 = vsel %vm584, %v354, 0
      %vm588 = vcmask 1043456
      %v590 = vsel %vm588, %v576, 0
      %v593 = vsel %vm588, %v577, 0
      %595 = vmatprep.subr.bf16.mxu0 0
      %596 = vmatpush1.bf16.msra.mxu0 0
      %597 = vmatprep.subr.bf16.mxu0 0
      %598 = vmatpush1.bf16.msra.mxu0 0
      %599 = vmatprep.subr.bf16.mxu0 0
      %600 = vmatpush1.bf16.msra.mxu0 0
      %601 = vmatprep.subr.bf16.mxu0 %v593
      %602 = vmatpush1.bf16.msra.mxu0 %v590
      %603 = vmatprep.subr.bf16.mxu0 %v575
      %604 = vmatpush1.bf16.msra.mxu0 %v574
      %605 = vmatprep.subr.bf16.mxu0 %v573
      %606 = vmatpush1.bf16.msra.mxu0 %v572
      %607 = vmatprep.subr.bf16.mxu0 %v571
      %608 = vmatpush1.bf16.msra.mxu0 %v570
      %609 = vmatprep.subr.bf16.mxu0 %v569
      %610 = vmatpush1.bf16.msra.mxu0 %v568
      %611 = vmatprep.subr.bf16.mxu0 0
      %612 = vmatpush2.bf16.msra.mxu0 0
      %613 = vmatprep.subr.bf16.mxu0 0
      %614 = vmatpush2.bf16.msra.mxu0 0
      %615 = vmatprep.subr.bf16.mxu0 0
      %616 = vmatpush2.bf16.msra.mxu0 0
      %617 = vmatprep.subr.bf16.mxu0 0
      %618 = vmatpush2.bf16.msra.mxu0 0
      %619 = vmatprep.subr.bf16.mxu0 0
      %620 = vmatpush2.bf16.msra.mxu0 0
      %621 = vmatprep.subr.bf16.mxu0 0
      %622 = vmatpush2.bf16.msra.mxu0 0
      %623 = vmatprep.subr.bf16.mxu0 0
      %624 = vmatpush2.bf16.msra.mxu0 0
      %625 = vmatprep.subr.bf16.mxu0 0
      %626 = vmatpush2.bf16.msra.mxu0 0
      %627 = vmatprep.mubr.bf16.mxu0 0
      %628 = vmatmul.mubr.bf16.gmra.mxu0 %v586
      %v629 = vpop.f32.mrf.mxu0
      %v630 = vadd.f32 %v582, %v629
      %v631 = vpop.f32.mrf.mxu0
      %v632 = vadd.f32 %v582, %v631
      %v633 = vpop.f32.mrf.mxu0
      %v634 = vpop.f32.mrf.mxu0
      %635 = vdwg.mxu0
      %v636 = vmax.f32 %v630, 0.0
      %v637 = vmax.f32 %v632, 0.0
      %639 = vset.pattern.permute.xlu0 0
      %640 = vperm.xlu0 %639, %v353
      %v641 = vpop.permute.xlu0 %640
      %v643 = vadd.f32 %v636, %v641
      %v644 = vadd.f32 %v637, %v641
      %v645 = vld [vmem:[%s4] sm:$0xf]
      %v646 = vpack.c.bf16 %v351, %v351
      %v647 = vpack.c.bf16 %v352, %v352
      %v648 = vld [vmem:[%s3] sm:$0xf]
      %649 = vrot.lane.b32.xlu0 %v643, 17
      %v650 = vpop.permute.xlu0 %649
      %651 = vrot.lane.b32.xlu0 %v644, 17
      %v652 = vpop.permute.xlu0 %651
      %v653 = vsel %vm361, %v650, %v652
      %v654 = vsel %vm361, %v652, %v650
      %v655 = vld [vmem:[%s8] ss:$8 sm:$0x3]
      %v657 = vlaneseq
      %v658 = vshrl.u32 %v657, 7
      %v659 = vsub.s32 0, %v658
      %v660 = vrot.slane %v655, %v659
      %v661 = vlaneseq
      %v662 = vshrl.u32 %v661, 7
      %v663 = vsub.s32 1, %v662
      %v664 = vrot.slane %v655, %v663
      %v667 = vmul.f32 %v654, %v660
      %v668 = vmul.f32 %v653, %v664
      %669 = vst [vmem:[#allocation3] sm:$0xff] %v667
      %670 = vst [vmem:[#allocation3 + $0x8] sm:$0xff] %v668
      %671 = vrot.lane.b32.xlu0 %v643, 16
      %v672 = vpop.permute.xlu0 %671
      %673 = vrot.lane.b32.xlu0 %v644, 16
      %v674 = vpop.permute.xlu0 %673
      %v675 = vsel %vm384, %v672, %v674
      %v676 = vsel %vm384, %v674, %v672
      %v677 = vld [vmem:[%s387] ss:$8 sm:$0x3]
      %v679 = vlaneseq
      %v680 = vshrl.u32 %v679, 7
      %v681 = vsub.s32 0, %v680
      %v682 = vrot.slane %v677, %v681
      %v683 = vlaneseq
      %v684 = vshrl.u32 %v683, 7
      %v685 = vsub.s32 1, %v684
      %v686 = vrot.slane %v677, %v685
      %v689 = vmul.f32 %v676, %v682
      %v690 = vmul.f32 %v675, %v686
      %691 = vst [vmem:[#allocation3 + $0x10] sm:$0xff] %v689
      %692 = vst [vmem:[#allocation3 + $0x18] sm:$0xff] %v690
      %693 = vrot.lane.b32.xlu0 %v643, 15
      %v694 = vpop.permute.xlu0 %693
      %695 = vrot.lane.b32.xlu0 %v644, 15
      %v696 = vpop.permute.xlu0 %695
      %v697 = vsel %vm408, %v694, %v696
      %v698 = vsel %vm408, %v696, %v694
      %v699 = vld [vmem:[%s411] ss:$8 sm:$0x3]
      %v701 = vlaneseq
      %v702 = vshrl.u32 %v701, 7
      %v703 = vsub.s32 0, %v702
      %v704 = vrot.slane %v699, %v703
      %v705 = vlaneseq
      %v706 = vshrl.u32 %v705, 7
      %v707 = vsub.s32 1, %v706
      %v708 = vrot.slane %v699, %v707
      %v711 = vmul.f32 %v698, %v704
      %v712 = vmul.f32 %v697, %v708
      %713 = vst [vmem:[#allocation3 + $0x20] sm:$0xff] %v711
      %714 = vst [vmem:[#allocation3 + $0x28] sm:$0xff] %v712
      %715 = vrot.lane.b32.xlu0 %v643, 1
      %v716 = vpop.permute.xlu0 %715
      %717 = vrot.lane.b32.xlu0 %v644, 1
      %v718 = vpop.permute.xlu0 %717
      %v719 = vsel %vm432, %v716, %v718
      %v720 = vsel %vm432, %v718, %v716
      %v721 = vld [vmem:[%s435] ss:$8 sm:$0x3]
      %v723 = vlaneseq
      %v724 = vshrl.u32 %v723, 7
      %v725 = vsub.s32 0, %v724
      %v726 = vrot.slane %v721, %v725
      %v727 = vlaneseq
      %v728 = vshrl.u32 %v727, 7
      %v729 = vsub.s32 1, %v728
      %v730 = vrot.slane %v721, %v729
      %v733 = vmul.f32 %v720, %v726
      %v734 = vmul.f32 %v719, %v730
      %735 = vst [vmem:[#allocation3 + $0x30] sm:$0xff] %v733
      %736 = vst [vmem:[#allocation3 + $0x38] sm:$0xff] %v734
      %737 = vst [vmem:[#allocation3 + $0x40] sm:$0xff] %v643
      %738 = vst [vmem:[#allocation3 + $0x48] sm:$0xff] %v644
      %739 = vrot.lane.b32.xlu0 %v643, 127
      %v740 = vpop.permute.xlu0 %739
      %741 = vrot.lane.b32.xlu0 %v644, 127
      %v742 = vpop.permute.xlu0 %741
      %v743 = vsel %vm458, %v740, %v742
      %v744 = vsel %vm458, %v742, %v740
      %v745 = vld [vmem:[%s461] ss:$8 sm:$0x3]
      %v747 = vlaneseq
      %v748 = vshrl.u32 %v747, 7
      %v749 = vsub.s32 0, %v748
      %v750 = vrot.slane %v745, %v749
      %v751 = vlaneseq
      %v752 = vshrl.u32 %v751, 7
      %v753 = vsub.s32 1, %v752
      %v754 = vrot.slane %v745, %v753
      %v757 = vmul.f32 %v743, %v750
      %v758 = vmul.f32 %v744, %v754
      %759 = vst [vmem:[#allocation3 + $0x50] sm:$0xff] %v757
      %760 = vst [vmem:[#allocation3 + $0x58] sm:$0xff] %v758
      %761 = vrot.lane.b32.xlu0 %v643, 113
      %v762 = vpop.permute.xlu0 %761
      %763 = vrot.lane.b32.xlu0 %v644, 113
      %v764 = vpop.permute.xlu0 %763
      %v765 = vsel %vm482, %v762, %v764
      %v766 = vsel %vm482, %v764, %v762
      %v767 = vld [vmem:[%s485] ss:$8 sm:$0x3]
      %v769 = vlaneseq
      %v770 = vshrl.u32 %v769, 7
      %v771 = vsub.s32 0, %v770
      %v772 = vrot.slane %v767, %v771
      %v773 = vlaneseq
      %v774 = vshrl.u32 %v773, 7
      %v775 = vsub.s32 1, %v774
      %v776 = vrot.slane %v767, %v775
      %v779 = vmul.f32 %v765, %v772
      %v780 = vmul.f32 %v766, %v776
      %781 = vst [vmem:[#allocation3 + $0x60] sm:$0xff] %v779
      %782 = vst [vmem:[#allocation3 + $0x68] sm:$0xff] %v780
      %783 = vrot.lane.b32.xlu0 %v643, 112
      %v784 = vpop.permute.xlu0 %783
      %785 = vrot.lane.b32.xlu0 %v644, 112
      %v786 = vpop.permute.xlu0 %785
      %v787 = vsel %vm506, %v784, %v786
      %v788 = vsel %vm506, %v786, %v784
      %v789 = vld [vmem:[%s509] ss:$8 sm:$0x3]
      %v791 = vlaneseq
      %v792 = vshrl.u32 %v791, 7
      %v793 = vsub.s32 0, %v792
      %v794 = vrot.slane %v789, %v793
      %v795 = vlaneseq
      %v796 = vshrl.u32 %v795, 7
      %v797 = vsub.s32 1, %v796
      %v798 = vrot.slane %v789, %v797
      %v801 = vmul.f32 %v787, %v794
      %v802 = vmul.f32 %v788, %v798
      %803 = vst [vmem:[#allocation3 + $0x70] sm:$0xff] %v801
      %804 = vst [vmem:[#allocation3 + $0x78] sm:$0xff] %v802
      %805 = vrot.lane.b32.xlu0 %v643, 111
      %v806 = vpop.permute.xlu0 %805
      %807 = vrot.lane.b32.xlu0 %v644, 111
      %v808 = vpop.permute.xlu0 %807
      %v809 = vsel %vm530, %v806, %v808
      %v810 = vsel %vm530, %v808, %v806
      %v811 = vld [vmem:[%s533] ss:$8 sm:$0x3]
      %v813 = vlaneseq
      %v814 = vshrl.u32 %v813, 7
      %v815 = vsub.s32 0, %v814
      %v816 = vrot.slane %v811, %v815
      %v817 = vlaneseq
      %v818 = vshrl.u32 %v817, 7
      %v819 = vsub.s32 1, %v818
      %v820 = vrot.slane %v811, %v819
      %v823 = vmul.f32 %v809, %v816
      %v824 = vmul.f32 %v810, %v820
      %825 = vst [vmem:[#allocation3 + $0x80] sm:$0xff] %v823
      %826 = vst [vmem:[#allocation3 + $0x88] sm:$0xff] %v824
      %v827 = vld [vmem:[#allocation3] sm:$0xff]
      %v828 = vld [vmem:[#allocation3 + $0x8] sm:$0xff]
      %v829 = vld [vmem:[#allocation3 + $0x10] sm:$0xff]
      %v830 = vld [vmem:[#allocation3 + $0x18] sm:$0xff]
      %v831 = vld [vmem:[#allocation3 + $0x20] sm:$0xff]
      %v832 = vld [vmem:[#allocation3 + $0x28] sm:$0xff]
      %v833 = vld [vmem:[#allocation3 + $0x30] sm:$0xff]
      %v834 = vld [vmem:[#allocation3 + $0x38] sm:$0xff]
      %v835 = vld [vmem:[#allocation3 + $0x40] sm:$0xff]
      %v836 = vld [vmem:[#allocation3 + $0x48] sm:$0xff]
      %v837 = vld [vmem:[#allocation3 + $0x50] sm:$0xff]
      %v838 = vld [vmem:[#allocation3 + $0x58] sm:$0xff]
      %v839 = vld [vmem:[#allocation3 + $0x60] sm:$0xff]
      %v840 = vld [vmem:[#allocation3 + $0x68] sm:$0xff]
      %v841 = vld [vmem:[#allocation3 + $0x70] sm:$0xff]
      %v842 = vld [vmem:[#allocation3 + $0x78] sm:$0xff]
      %v843 = vld [vmem:[#allocation3 + $0x80] sm:$0xff]
      %v844 = vld [vmem:[#allocation3 + $0x88] sm:$0xff]
      %v845 = vpack.c.bf16 %v829, %v827
      %v846 = vpack.c.bf16 %v830, %v828
      %v847 = vpack.c.bf16 %v833, %v831
      %v848 = vpack.c.bf16 %v834, %v832
      %v849 = vpack.c.bf16 %v837, %v835
      %v850 = vpack.c.bf16 %v838, %v836
      %v851 = vpack.c.bf16 %v841, %v839
      %v852 = vpack.c.bf16 %v842, %v840
      %v853 = vpack.c.bf16 %v843, %v843
      %v854 = vpack.c.bf16 %v844, %v844
      %v856 = vsel %vm584, %v648, 0
      %v859 = vsel %vm588, %v853, 0
      %v862 = vsel %vm588, %v854, 0
      %864 = vmatprep.subr.bf16.mxu0 0
      %865 = vmatpush1.bf16.msra.mxu0 0
      %866 = vmatprep.subr.bf16.mxu0 0
      %867 = vmatpush1.bf16.msra.mxu0 0
      %868 = vmatprep.subr.bf16.mxu0 0
      %869 = vmatpush1.bf16.msra.mxu0 0
      %870 = vmatprep.subr.bf16.mxu0 %v862
      %871 = vmatpush1.bf16.msra.mxu0 %v859
      %872 = vmatprep.subr.bf16.mxu0 %v852
      %873 = vmatpush1.bf16.msra.mxu0 %v851
      %874 = vmatprep.subr.bf16.mxu0 %v850
      %875 = vmatpush1.bf16.msra.mxu0 %v849
      %876 = vmatprep.subr.bf16.mxu0 %v848
      %877 = vmatpush1.bf16.msra.mxu0 %v847
      %878 = vmatprep.subr.bf16.mxu0 %v846
      %879 = vmatpush1.bf16.msra.mxu0 %v845
      %880 = vmatprep.subr.bf16.mxu0 0
      %881 = vmatpush2.bf16.msra.mxu0 0
      %882 = vmatprep.subr.bf16.mxu0 0
      %883 = vmatpush2.bf16.msra.mxu0 0
      %884 = vmatprep.subr.bf16.mxu0 0
      %885 = vmatpush2.bf16.msra.mxu0 0
      %886 = vmatprep.subr.bf16.mxu0 0
      %887 = vmatpush2.bf16.msra.mxu0 0
      %888 = vmatprep.subr.bf16.mxu0 0
      %889 = vmatpush2.bf16.msra.mxu0 0
      %890 = vmatprep.subr.bf16.mxu0 0
      %891 = vmatpush2.bf16.msra.mxu0 0
      %892 = vmatprep.subr.bf16.mxu0 0
      %893 = vmatpush2.bf16.msra.mxu0 0
      %894 = vmatprep.subr.bf16.mxu0 0
      %895 = vmatpush2.bf16.msra.mxu0 0
      %896 = vmatprep.mubr.bf16.mxu0 0
      %897 = vmatmul.mubr.bf16.gmra.mxu0 %v856
      %v898 = vpop.f32.mrf.mxu0
      %v899 = vadd.f32 0.0, %v898
      %v900 = vpop.f32.mrf.mxu0
      %v901 = vadd.f32 0.0, %v900
      %v902 = vpop.f32.mrf.mxu0
      %v903 = vpop.f32.mrf.mxu0
      %904 = vdwg.mxu0
      %vm905 = vcmask 64512
      %v907 = vsel %vm905, %v645, 0
      %v910 = vsel %vm588, %v646, 0
      %v913 = vsel %vm588, %v647, 0
      %915 = vmatprep.subr.bf16.mxu0 0
      %916 = vmatpush1.bf16.msra.mxu0 0
      %917 = vmatprep.subr.bf16.mxu0 0
      %918 = vmatpush1.bf16.msra.mxu0 0
      %919 = vmatprep.subr.bf16.mxu0 0
      %920 = vmatpush1.bf16.msra.mxu0 0
      %921 = vmatprep.subr.bf16.mxu0 0
      %922 = vmatpush1.bf16.msra.mxu0 0
      %923 = vmatprep.subr.bf16.mxu0 0
      %924 = vmatpush1.bf16.msra.mxu0 0
      %925 = vmatprep.subr.bf16.mxu0 0
      %926 = vmatpush1.bf16.msra.mxu0 0
      %927 = vmatprep.subr.bf16.mxu0 0
      %928 = vmatpush1.bf16.msra.mxu0 0
      %929 = vmatprep.subr.bf16.mxu0 %v913
      %930 = vmatpush1.bf16.msra.mxu0 %v910
      %931 = vmatprep.subr.bf16.mxu0 0
      %932 = vmatpush2.bf16.msra.mxu0 0
      %933 = vmatprep.subr.bf16.mxu0 0
      %934 = vmatpush2.bf16.msra.mxu0 0
      %935 = vmatprep.subr.bf16.mxu0 0
      %936 = vmatpush2.bf16.msra.mxu0 0
      %937 = vmatprep.subr.bf16.mxu0 0
      %938 = vmatpush2.bf16.msra.mxu0 0
      %939 = vmatprep.subr.bf16.mxu0 0
      %940 = vmatpush2.bf16.msra.mxu0 0
      %941 = vmatprep.subr.bf16.mxu0 0
      %942 = vmatpush2.bf16.msra.mxu0 0
      %943 = vmatprep.subr.bf16.mxu0 0
      %944 = vmatpush2.bf16.msra.mxu0 0
      %945 = vmatprep.subr.bf16.mxu0 0
      %946 = vmatpush2.bf16.msra.mxu0 0
      %947 = vmatprep.mubr.bf16.mxu0 0
      %948 = vmatmul.mubr.bf16.gmra.mxu0 %v907
      %v949 = vpop.f32.mrf.mxu0
      %v950 = vadd.f32 %v899, %v949
      %v951 = vpop.f32.mrf.mxu0
      %v952 = vadd.f32 %v901, %v951
      %v953 = vpop.f32.mrf.mxu0
      %v954 = vpop.f32.mrf.mxu0
      %955 = vdwg.mxu0
      %v956 = vld [vmem:[%s7] sm:$0xff]
      %958 = vset.pattern.permute.xlu0 1
      %959 = vperm.xlu0 %958, %v956
      %v960 = vpop.permute.xlu0 %959
      %v962 = vadd.f32 %v950, %v960
      %v963 = vadd.f32 %v952, %v960
      %v964 = vpack.c.bf16 %v962, %v962
      %v965 = vpack.c.bf16 %v963, %v963
      %v966 = vld [vmem:[%s5] sm:$0xf]
      %v967 = vld [vmem:[%s5 + $0x4] sm:$0xf]
      %v968 = vld [vmem:[%s5 + $0x8] sm:$0xf]
      %v972 = vunpack.c.l.b16 %v966
      %v973 = vunpack.c.l.b16 %v967
      %v974 = vunpack.c.l.b16 %v968
      %v975 = vpack.c.b16 %v973, %v972
      %v976 = vpack.c.b16 %v974, %v974
      %v978 = vsel %vm905, %v975, 0
      %v981 = vsel %vm905, %v976, 0
      %v984 = vsel %vm588, %v964, 0
      %v987 = vsel %vm588, %v965, 0
      %989 = vmatprep.subr.bf16.mxu0 0
      %990 = vmatpush1.bf16.msra.mxu0 0
      %991 = vmatprep.subr.bf16.mxu0 0
      %992 = vmatpush1.bf16.msra.mxu0 0
      %993 = vmatprep.subr.bf16.mxu0 0
      %994 = vmatpush1.bf16.msra.mxu0 0
      %995 = vmatprep.subr.bf16.mxu0 0
      %996 = vmatpush1.bf16.msra.mxu0 0
      %997 = vmatprep.subr.bf16.mxu0 0
      %998 = vmatpush1.bf16.msra.mxu0 0
      %999 = vmatprep.subr.bf16.mxu0 0
      %1000 = vmatpush1.bf16.msra.mxu0 0
      %1001 = vmatprep.subr.bf16.mxu0 0
      %1002 = vmatpush1.bf16.msra.mxu0 0
      %1003 = vmatprep.subr.bf16.mxu0 %v987
      %1004 = vmatpush1.bf16.msra.mxu0 %v984
      %1005 = vmatprep.subr.bf16.mxu0 0
      %1006 = vmatpush2.bf16.msra.mxu0 0
      %1007 = vmatprep.subr.bf16.mxu0 0
      %1008 = vmatpush2.bf16.msra.mxu0 0
      %1009 = vmatprep.subr.bf16.mxu0 0
      %1010 = vmatpush2.bf16.msra.mxu0 0
      %1011 = vmatprep.subr.bf16.mxu0 0
      %1012 = vmatpush2.bf16.msra.mxu0 0
      %1013 = vmatprep.subr.bf16.mxu0 0
      %1014 = vmatpush2.bf16.msra.mxu0 0
      %1015 = vmatprep.subr.bf16.mxu0 0
      %1016 = vmatpush2.bf16.msra.mxu0 0
      %1017 = vmatprep.subr.bf16.mxu0 0
      %1018 = vmatpush2.bf16.msra.mxu0 0
      %1019 = vmatprep.subr.bf16.mxu0 0
      %1020 = vmatpush2.bf16.msra.mxu0 0
      %1021 = vmatprep.mubr.bf16.mxu0 0
      %1022 = vmatmul.mubr.bf16.gmra.mxu0 %v978
      %v1023 = vpop.f32.mrf.mxu0
      %v1024 = vadd.f32 0.0, %v1023
      %v1025 = vpop.f32.mrf.mxu0
      %v1026 = vadd.f32 0.0, %v1025
      %v1027 = vpop.f32.mrf.mxu0
      %v1028 = vadd.f32 0.0, %v1027
      %v1029 = vpop.f32.mrf.mxu0
      %v1030 = vadd.f32 0.0, %v1029
      %1031 = vmatprep.mubr.bf16.mxu0 0
      %1032 = vmatmul.mubr.bf16.gmra.mxu0 %v981
      %v1033 = vpop.f32.mrf.mxu0
      %v1034 = vadd.f32 0.0, %v1033
      %v1035 = vpop.f32.mrf.mxu0
      %v1036 = vadd.f32 0.0, %v1035
      %v1037 = vpop.f32.mrf.mxu0
      %v1038 = vpop.f32.mrf.mxu0
      %1039 = vdwg.mxu0
      %1040 = vset.pattern.permute.xlu0 2
      %1041 = vperm.xlu0 %1040, %v956
      %v1042 = vpop.permute.xlu0 %1041
      %v1044 = vadd.f32 %v1024, %v1042
      %v1045 = vadd.f32 %v1026, %v1042
      %1046 = vset.pattern.permute.xlu0 3
      %1047 = vperm.xlu0 %1046, %v956
      %v1048 = vpop.permute.xlu0 %1047
      %v1050 = vadd.f32 %v1028, %v1048
      %v1051 = vadd.f32 %v1030, %v1048
      %1052 = vset.pattern.permute.xlu0 4
      %1053 = vperm.xlu0 %1052, %v956
      %v1054 = vpop.permute.xlu0 %1053
      %v1056 = vadd.f32 %v1034, %v1054
      %v1057 = vadd.f32 %v1036, %v1054
      %v1058 = vpack.c.bf16 %v1044, %v1044
      %v1059 = vpack.c.bf16 %v1045, %v1045
      %v1060 = vpack.c.bf16 %v1050, %v1050
      %v1061 = vpack.c.bf16 %v1051, %v1051
      %1062 = vxpose.xlu0.c.b16.start [1/8] %v1058, 128
      %1063 = vxpose.xlu0.c.b16.cont [2/8] 0, 128
      %1064 = vxpose.xlu0.c.b16.cont [3/8] 0, 128
      %1065 = vxpose.xlu0.c.b16.cont [4/8] 0, 128
      %1066 = vxpose.xlu0.c.b16.cont [5/8] 0, 128
      %1067 = vxpose.xlu0.c.b16.cont [6/8] 0, 128
      %1068 = vxpose.xlu0.c.b16.cont [7/8] 0, 128
      %1069 = vxpose.xlu0.c.b16.end [8/8] 0, 128
      %v1070 = vpop.trf.xlu0
      %v1071 = vpop.trf.xlu0
      %v1072 = vpop.trf.xlu0
      %v1073 = vpop.trf.xlu0
      %v1074 = vpop.trf.xlu0
      %v1075 = vpop.trf.xlu0
      %v1076 = vpop.trf.xlu0
      %v1077 = vpop.trf.xlu0
      %1078 = vxpose.xlu0.c.b16.start [1/8] %v1059, 128
      %1079 = vxpose.xlu0.c.b16.cont [2/8] 0, 128
      %1080 = vxpose.xlu0.c.b16.cont [3/8] 0, 128
      %1081 = vxpose.xlu0.c.b16.cont [4/8] 0, 128
      %1082 = vxpose.xlu0.c.b16.cont [5/8] 0, 128
      %1083 = vxpose.xlu0.c.b16.cont [6/8] 0, 128
      %1084 = vxpose.xlu0.c.b16.cont [7/8] 0, 128
      %1085 = vxpose.xlu0.c.b16.end [8/8] 0, 128
      %v1086 = vpop.trf.xlu0
      %v1087 = vpop.trf.xlu0
      %v1088 = vpop.trf.xlu0
      %v1089 = vpop.trf.xlu0
      %v1090 = vpop.trf.xlu0
      %v1091 = vpop.trf.xlu0
      %v1092 = vpop.trf.xlu0
      %v1093 = vpop.trf.xlu0
      %v1095 = vsel %vm905, %v1070, 0
      %v1098 = vsel %vm905, %v1071, 0
      %v1101 = vsel %vm905, %v1072, 0
      %v1104 = vsel %vm905, %v1073, 0
      %v1107 = vsel %vm905, %v1074, 0
      %v1110 = vsel %vm905, %v1075, 0
      %v1113 = vsel %vm905, %v1076, 0
      %v1116 = vsel %vm905, %v1077, 0
      %v1119 = vsel %vm905, %v1086, 0
      %v1122 = vsel %vm905, %v1087, 0
      %v1125 = vsel %vm905, %v1088, 0
      %v1128 = vsel %vm905, %v1089, 0
      %v1131 = vsel %vm905, %v1090, 0
      %v1134 = vsel %vm905, %v1091, 0
      %v1137 = vsel %vm905, %v1092, 0
      %v1140 = vsel %vm905, %v1093, 0
      %v1143 = vsel %vm588, %v1060, 0
      %v1146 = vsel %vm588, %v1061, 0
      %1148 = vmatprep.subr.bf16.mxu0 0
      %1149 = vmatpush1.bf16.msra.mxu0 0
      %1150 = vmatprep.subr.bf16.mxu0 0
      %1151 = vmatpush1.bf16.msra.mxu0 0
      %1152 = vmatprep.subr.bf16.mxu0 0
      %1153 = vmatpush1.bf16.msra.mxu0 0
      %1154 = vmatprep.subr.bf16.mxu0 0
      %1155 = vmatpush1.bf16.msra.mxu0 0
      %1156 = vmatprep.subr.bf16.mxu0 0
      %1157 = vmatpush1.bf16.msra.mxu0 0
      %1158 = vmatprep.subr.bf16.mxu0 0
      %1159 = vmatpush1.bf16.msra.mxu0 0
      %1160 = vmatprep.subr.bf16.mxu0 0
      %1161 = vmatpush1.bf16.msra.mxu0 0
      %1162 = vmatprep.subr.bf16.mxu0 %v1146
      %1163 = vmatpush1.bf16.msra.mxu0 %v1143
      %1164 = vmatprep.subr.bf16.mxu0 0
      %1165 = vmatpush2.bf16.msra.mxu0 0
      %1166 = vmatprep.subr.bf16.mxu0 0
      %1167 = vmatpush2.bf16.msra.mxu0 0
      %1168 = vmatprep.subr.bf16.mxu0 0
      %1169 = vmatpush2.bf16.msra.mxu0 0
      %1170 = vmatprep.subr.bf16.mxu0 0
      %1171 = vmatpush2.bf16.msra.mxu0 0
      %1172 = vmatprep.subr.bf16.mxu0 0
      %1173 = vmatpush2.bf16.msra.mxu0 0
      %1174 = vmatprep.subr.bf16.mxu0 0
      %1175 = vmatpush2.bf16.msra.mxu0 0
      %1176 = vmatprep.subr.bf16.mxu0 0
      %1177 = vmatpush2.bf16.msra.mxu0 0
      %1178 = vmatprep.subr.bf16.mxu0 0
      %1179 = vmatpush2.bf16.msra.mxu0 0
      %1180 = vmatprep.mubr.bf16.mxu0 0
      %1181 = vmatmul.mubr.bf16.gmra.mxu0 %v1095
      %v1182 = vpop.f32.mrf.mxu0
      %v1183 = vadd.f32 0.0, %v1182
      %v1184 = vpop.f32.mrf.mxu0
      %v1185 = vadd.f32 0.0, %v1184
      %v1186 = vpop.f32.mrf.mxu0
      %v1187 = vadd.f32 0.0, %v1186
      %v1188 = vpop.f32.mrf.mxu0
      %v1189 = vadd.f32 0.0, %v1188
      %1190 = vmatprep.mubr.bf16.mxu0 0
      %1191 = vmatmul.mubr.bf16.gmra.mxu0 %v1098
      %v1192 = vpop.f32.mrf.mxu0
      %v1193 = vadd.f32 0.0, %v1192
      %v1194 = vpop.f32.mrf.mxu0
      %v1195 = vadd.f32 0.0, %v1194
      %v1196 = vpop.f32.mrf.mxu0
      %v1197 = vadd.f32 0.0, %v1196
      %v1198 = vpop.f32.mrf.mxu0
      %v1199 = vadd.f32 0.0, %v1198
      %1200 = vmatprep.mubr.bf16.mxu0 0
      %1201 = vmatmul.mubr.bf16.gmra.mxu0 %v1101
      %v1202 = vpop.f32.mrf.mxu0
      %v1203 = vadd.f32 0.0, %v1202
      %v1204 = vpop.f32.mrf.mxu0
      %v1205 = vadd.f32 0.0, %v1204
      %v1206 = vpop.f32.mrf.mxu0
      %v1207 = vadd.f32 0.0, %v1206
      %v1208 = vpop.f32.mrf.mxu0
      %v1209 = vadd.f32 0.0, %v1208
      %1210 = vmatprep.mubr.bf16.mxu0 0
      %1211 = vmatmul.mubr.bf16.gmra.mxu0 %v1104
      %v1212 = vpop.f32.mrf.mxu0
      %v1213 = vadd.f32 0.0, %v1212
      %v1214 = vpop.f32.mrf.mxu0
      %v1215 = vadd.f32 0.0, %v1214
      %v1216 = vpop.f32.mrf.mxu0
      %v1217 = vadd.f32 0.0, %v1216
      %v1218 = vpop.f32.mrf.mxu0
      %v1219 = vadd.f32 0.0, %v1218
      %1220 = vmatprep.mubr.bf16.mxu0 0
      %1221 = vmatmul.mubr.bf16.gmra.mxu0 %v1107
      %v1222 = vpop.f32.mrf.mxu0
      %v1223 = vadd.f32 0.0, %v1222
      %v1224 = vpop.f32.mrf.mxu0
      %v1225 = vadd.f32 0.0, %v1224
      %v1226 = vpop.f32.mrf.mxu0
      %v1227 = vadd.f32 0.0, %v1226
      %v1228 = vpop.f32.mrf.mxu0
      %v1229 = vadd.f32 0.0, %v1228
      %1230 = vmatprep.mubr.bf16.mxu0 0
      %1231 = vmatmul.mubr.bf16.gmra.mxu0 %v1110
      %v1232 = vpop.f32.mrf.mxu0
      %v1233 = vadd.f32 0.0, %v1232
      %v1234 = vpop.f32.mrf.mxu0
      %v1235 = vadd.f32 0.0, %v1234
      %v1236 = vpop.f32.mrf.mxu0
      %v1237 = vadd.f32 0.0, %v1236
      %v1238 = vpop.f32.mrf.mxu0
      %v1239 = vadd.f32 0.0, %v1238
      %1240 = vmatprep.mubr.bf16.mxu0 0
      %1241 = vmatmul.mubr.bf16.gmra.mxu0 %v1113
      %v1242 = vpop.f32.mrf.mxu0
      %v1243 = vadd.f32 0.0, %v1242
      %v1244 = vpop.f32.mrf.mxu0
      %v1245 = vadd.f32 0.0, %v1244
      %v1246 = vpop.f32.mrf.mxu0
      %v1247 = vadd.f32 0.0, %v1246
      %v1248 = vpop.f32.mrf.mxu0
      %v1249 = vadd.f32 0.0, %v1248
      %1250 = vmatprep.mubr.bf16.mxu0 0
      %1251 = vmatmul.mubr.bf16.gmra.mxu0 %v1116
      %v1252 = vpop.f32.mrf.mxu0
      %v1253 = vadd.f32 0.0, %v1252
      %v1254 = vpop.f32.mrf.mxu0
      %v1255 = vadd.f32 0.0, %v1254
      %v1256 = vpop.f32.mrf.mxu0
      %v1257 = vadd.f32 0.0, %v1256
      %v1258 = vpop.f32.mrf.mxu0
      %v1259 = vadd.f32 0.0, %v1258
      %1260 = vmatprep.mubr.bf16.mxu0 0
      %1261 = vmatmul.mubr.bf16.gmra.mxu0 %v1119
      %v1262 = vpop.f32.mrf.mxu0
      %v1263 = vadd.f32 0.0, %v1262
      %v1264 = vpop.f32.mrf.mxu0
      %v1265 = vadd.f32 0.0, %v1264
      %v1266 = vpop.f32.mrf.mxu0
      %v1267 = vadd.f32 0.0, %v1266
      %v1268 = vpop.f32.mrf.mxu0
      %v1269 = vadd.f32 0.0, %v1268
      %1270 = vmatprep.mubr.bf16.mxu0 0
      %1271 = vmatmul.mubr.bf16.gmra.mxu0 %v1122
      %v1272 = vpop.f32.mrf.mxu0
      %v1273 = vadd.f32 0.0, %v1272
      %v1274 = vpop.f32.mrf.mxu0
      %v1275 = vadd.f32 0.0, %v1274
      %v1276 = vpop.f32.mrf.mxu0
      %v1277 = vadd.f32 0.0, %v1276
      %v1278 = vpop.f32.mrf.mxu0
      %v1279 = vadd.f32 0.0, %v1278
      %1280 = vmatprep.mubr.bf16.mxu0 0
      %1281 = vmatmul.mubr.bf16.gmra.mxu0 %v1125
      %v1282 = vpop.f32.mrf.mxu0
      %v1283 = vadd.f32 0.0, %v1282
      %v1284 = vpop.f32.mrf.mxu0
      %v1285 = vadd.f32 0.0, %v1284
      %v1286 = vpop.f32.mrf.mxu0
      %v1287 = vadd.f32 0.0, %v1286
      %v1288 = vpop.f32.mrf.mxu0
      %v1289 = vadd.f32 0.0, %v1288
      %1290 = vmatprep.mubr.bf16.mxu0 0
      %1291 = vmatmul.mubr.bf16.gmra.mxu0 %v1128
      %v1292 = vpop.f32.mrf.mxu0
      %v1293 = vadd.f32 0.0, %v1292
      %v1294 = vpop.f32.mrf.mxu0
      %v1295 = vadd.f32 0.0, %v1294
      %v1296 = vpop.f32.mrf.mxu0
      %v1297 = vadd.f32 0.0, %v1296
      %v1298 = vpop.f32.mrf.mxu0
      %v1299 = vadd.f32 0.0, %v1298
      %1300 = vmatprep.mubr.bf16.mxu0 0
      %1301 = vmatmul.mubr.bf16.gmra.mxu0 %v1131
      %v1302 = vpop.f32.mrf.mxu0
      %v1303 = vadd.f32 0.0, %v1302
      %v1304 = vpop.f32.mrf.mxu0
      %v1305 = vadd.f32 0.0, %v1304
      %v1306 = vpop.f32.mrf.mxu0
      %v1307 = vadd.f32 0.0, %v1306
      %v1308 = vpop.f32.mrf.mxu0
      %v1309 = vadd.f32 0.0, %v1308
      %1310 = vmatprep.mubr.bf16.mxu0 0
      %1311 = vmatmul.mubr.bf16.gmra.mxu0 %v1134
      %v1312 = vpop.f32.mrf.mxu0
      %v1313 = vadd.f32 0.0, %v1312
      %v1314 = vpop.f32.mrf.mxu0
      %v1315 = vadd.f32 0.0, %v1314
      %v1316 = vpop.f32.mrf.mxu0
      %v1317 = vadd.f32 0.0, %v1316
      %v1318 = vpop.f32.mrf.mxu0
      %v1319 = vadd.f32 0.0, %v1318
      %1320 = vmatprep.mubr.bf16.mxu0 0
      %1321 = vmatmul.mubr.bf16.gmra.mxu0 %v1137
      %v1322 = vpop.f32.mrf.mxu0
      %v1323 = vadd.f32 0.0, %v1322
      %v1324 = vpop.f32.mrf.mxu0
      %v1325 = vadd.f32 0.0, %v1324
      %v1326 = vpop.f32.mrf.mxu0
      %v1327 = vadd.f32 0.0, %v1326
      %v1328 = vpop.f32.mrf.mxu0
      %v1329 = vadd.f32 0.0, %v1328
      %1330 = vmatprep.mubr.bf16.mxu0 0
      %1331 = vmatmul.mubr.bf16.gmra.mxu0 %v1140
      %v1332 = vpop.f32.mrf.mxu0
      %v1333 = vadd.f32 0.0, %v1332
      %v1334 = vpop.f32.mrf.mxu0
      %v1335 = vadd.f32 0.0, %v1334
      %v1336 = vpop.f32.mrf.mxu0
      %v1337 = vadd.f32 0.0, %v1336
      %v1338 = vpop.f32.mrf.mxu0
      %v1339 = vadd.f32 0.0, %v1338
      %1340 = vdwg.mxu0
      %v1341 = vmax.f32 %v1183, %v1185
      %1342 = vmax.xlane.f32.xlu0 %v1341
      %v1343 = vpop.xlane.xlu0 %1342
      %v1344 = vmax.f32 %v1187, %v1189
      %1345 = vmax.xlane.f32.xlu0 %v1344
      %v1346 = vpop.xlane.xlu0 %1345
      %v1347 = vmax.f32 %v1193, %v1195
      %1348 = vmax.xlane.f32.xlu0 %v1347
      %v1349 = vpop.xlane.xlu0 %1348
      %v1350 = vmax.f32 %v1197, %v1199
      %1351 = vmax.xlane.f32.xlu0 %v1350
      %v1352 = vpop.xlane.xlu0 %1351
      %v1353 = vmax.f32 %v1203, %v1205
      %1354 = vmax.xlane.f32.xlu0 %v1353
      %v1355 = vpop.xlane.xlu0 %1354
      %v1356 = vmax.f32 %v1207, %v1209
      %1357 = vmax.xlane.f32.xlu0 %v1356
      %v1358 = vpop.xlane.xlu0 %1357
      %v1359 = vmax.f32 %v1213, %v1215
      %1360 = vmax.xlane.f32.xlu0 %v1359
      %v1361 = vpop.xlane.xlu0 %1360
      %v1362 = vmax.f32 %v1217, %v1219
      %1363 = vmax.xlane.f32.xlu0 %v1362
      %v1364 = vpop.xlane.xlu0 %1363
      %v1365 = vmax.f32 %v1223, %v1225
      %1366 = vmax.xlane.f32.xlu0 %v1365
      %v1367 = vpop.xlane.xlu0 %1366
      %v1368 = vmax.f32 %v1227, %v1229
      %1369 = vmax.xlane.f32.xlu0 %v1368
      %v1370 = vpop.xlane.xlu0 %1369
      %v1371 = vmax.f32 %v1233, %v1235
      %1372 = vmax.xlane.f32.xlu0 %v1371
      %v1373 = vpop.xlane.xlu0 %1372
      %v1374 = vmax.f32 %v1237, %v1239
      %1375 = vmax.xlane.f32.xlu0 %v1374
      %v1376 = vpop.xlane.xlu0 %1375
      %v1377 = vmax.f32 %v1243, %v1245
      %1378 = vmax.xlane.f32.xlu0 %v1377
      %v1379 = vpop.xlane.xlu0 %1378
      %v1380 = vmax.f32 %v1247, %v1249
      %1381 = vmax.xlane.f32.xlu0 %v1380
      %v1382 = vpop.xlane.xlu0 %1381
      %v1383 = vmax.f32 %v1253, %v1255
      %1384 = vmax.xlane.f32.xlu0 %v1383
      %v1385 = vpop.xlane.xlu0 %1384
      %v1386 = vmax.f32 %v1257, %v1259
      %1387 = vmax.xlane.f32.xlu0 %v1386
      %v1388 = vpop.xlane.xlu0 %1387
      %v1389 = vmax.f32 %v1263, %v1265
      %1390 = vmax.xlane.f32.xlu0 %v1389
      %v1391 = vpop.xlane.xlu0 %1390
      %v1392 = vmax.f32 %v1267, %v1269
      %1393 = vmax.xlane.f32.xlu0 %v1392
      %v1394 = vpop.xlane.xlu0 %1393
      %v1395 = vmax.f32 %v1273, %v1275
      %1396 = vmax.xlane.f32.xlu0 %v1395
      %v1397 = vpop.xlane.xlu0 %1396
      %v1398 = vmax.f32 %v1277, %v1279
      %1399 = vmax.xlane.f32.xlu0 %v1398
      %v1400 = vpop.xlane.xlu0 %1399
      %v1401 = vmax.f32 %v1283, %v1285
      %1402 = vmax.xlane.f32.xlu0 %v1401
      %v1403 = vpop.xlane.xlu0 %1402
      %v1404 = vmax.f32 %v1287, %v1289
      %1405 = vmax.xlane.f32.xlu0 %v1404
      %v1406 = vpop.xlane.xlu0 %1405
      %v1407 = vmax.f32 %v1293, %v1295
      %1408 = vmax.xlane.f32.xlu0 %v1407
      %v1409 = vpop.xlane.xlu0 %1408
      %v1410 = vmax.f32 %v1297, %v1299
      %1411 = vmax.xlane.f32.xlu0 %v1410
      %v1412 = vpop.xlane.xlu0 %1411
      %v1413 = vmax.f32 %v1303, %v1305
      %1414 = vmax.xlane.f32.xlu0 %v1413
      %v1415 = vpop.xlane.xlu0 %1414
      %v1416 = vmax.f32 %v1307, %v1309
      %1417 = vmax.xlane.f32.xlu0 %v1416
      %v1418 = vpop.xlane.xlu0 %1417
      %v1419 = vmax.f32 %v1313, %v1315
      %1420 = vmax.xlane.f32.xlu0 %v1419
      %v1421 = vpop.xlane.xlu0 %1420
      %v1422 = vmax.f32 %v1317, %v1319
      %1423 = vmax.xlane.f32.xlu0 %v1422
      %v1424 = vpop.xlane.xlu0 %1423
      %v1425 = vmax.f32 %v1323, %v1325
      %1426 = vmax.xlane.f32.xlu0 %v1425
      %v1427 = vpop.xlane.xlu0 %1426
      %v1428 = vmax.f32 %v1327, %v1329
      %1429 = vmax.xlane.f32.xlu0 %v1428
      %v1430 = vpop.xlane.xlu0 %1429
      %v1431 = vmax.f32 %v1333, %v1335
      %1432 = vmax.xlane.f32.xlu0 %v1431
      %v1433 = vpop.xlane.xlu0 %1432
      %v1434 = vmax.f32 %v1337, %v1339
      %1435 = vmax.xlane.f32.xlu0 %v1434
      %v1436 = vpop.xlane.xlu0 %1435
      %v1437 = vsub.f32 %v1183, %v1343
      %v1438 = vsub.f32 %v1185, %v1343
      %v1439 = vsub.f32 %v1187, %v1346
      %v1440 = vsub.f32 %v1189, %v1346
      %v1441 = vsub.f32 %v1193, %v1349
      %v1442 = vsub.f32 %v1195, %v1349
      %v1443 = vsub.f32 %v1197, %v1352
      %v1444 = vsub.f32 %v1199, %v1352
      %v1445 = vsub.f32 %v1203, %v1355
      %v1446 = vsub.f32 %v1205, %v1355
      %v1447 = vsub.f32 %v1207, %v1358
      %v1448 = vsub.f32 %v1209, %v1358
      %v1449 = vsub.f32 %v1213, %v1361
      %v1450 = vsub.f32 %v1215, %v1361
      %v1451 = vsub.f32 %v1217, %v1364
      %v1452 = vsub.f32 %v1219, %v1364
      %v1453 = vsub.f32 %v1223, %v1367
      %v1454 = vsub.f32 %v1225, %v1367
      %v1455 = vsub.f32 %v1227, %v1370
      %v1456 = vsub.f32 %v1229, %v1370
      %v1457 = vsub.f32 %v1233, %v1373
      %v1458 = vsub.f32 %v1235, %v1373
      %v1459 = vsub.f32 %v1237, %v1376
      %v1460 = vsub.f32 %v1239, %v1376
      %v1461 = vsub.f32 %v1243, %v1379
      %v1462 = vsub.f32 %v1245, %v1379
      %v1463 = vsub.f32 %v1247, %v1382
      %v1464 = vsub.f32 %v1249, %v1382
      %v1465 = vsub.f32 %v1253, %v1385
      %v1466 = vsub.f32 %v1255, %v1385
      %v1467 = vsub.f32 %v1257, %v1388
      %v1468 = vsub.f32 %v1259, %v1388
      %v1469 = vsub.f32 %v1263, %v1391
      %v1470 = vsub.f32 %v1265, %v1391
      %v1471 = vsub.f32 %v1267, %v1394
      %v1472 = vsub.f32 %v1269, %v1394
      %v1473 = vsub.f32 %v1273, %v1397
      %v1474 = vsub.f32 %v1275, %v1397
      %v1475 = vsub.f32 %v1277, %v1400
      %v1476 = vsub.f32 %v1279, %v1400
      %v1477 = vsub.f32 %v1283, %v1403
      %v1478 = vsub.f32 %v1285, %v1403
      %v1479 = vsub.f32 %v1287, %v1406
      %v1480 = vsub.f32 %v1289, %v1406
      %v1481 = vsub.f32 %v1293, %v1409
      %v1482 = vsub.f32 %v1295, %v1409
      %v1483 = vsub.f32 %v1297, %v1412
      %v1484 = vsub.f32 %v1299, %v1412
      %v1485 = vsub.f32 %v1303, %v1415
      %v1486 = vsub.f32 %v1305, %v1415
      %v1487 = vsub.f32 %v1307, %v1418
      %v1488 = vsub.f32 %v1309, %v1418
      %v1489 = vsub.f32 %v1313, %v1421
      %v1490 = vsub.f32 %v1315, %v1421
      %v1491 = vsub.f32 %v1317, %v1424
      %v1492 = vsub.f32 %v1319, %v1424
      %v1493 = vsub.f32 %v1323, %v1427
      %v1494 = vsub.f32 %v1325, %v1427
      %v1495 = vsub.f32 %v1327, %v1430
      %v1496 = vsub.f32 %v1329, %v1430
      %v1497 = vsub.f32 %v1333, %v1433
      %v1498 = vsub.f32 %v1335, %v1433
      %v1499 = vsub.f32 %v1337, %v1436
      %v1500 = vsub.f32 %v1339, %v1436
      %v1501 = vmul.f32 %v1437, 1.442695
      %v1502 = vpow.pop %v1501
      %v1503 = vmul.f32 %v1438, 1.442695
      %v1504 = vpow.pop %v1503
      %v1505 = vmul.f32 %v1439, 1.442695
      %v1506 = vpow.pop %v1505
      %v1507 = vmul.f32 %v1440, 1.442695
      %v1508 = vpow.pop %v1507
      %v1509 = vmul.f32 %v1441, 1.442695
      %v1510 = vpow.pop %v1509
      %v1511 = vmul.f32 %v1442, 1.442695
      %v1512 = vpow.pop %v1511
      %v1513 = vmul.f32 %v1443, 1.442695
      %v1514 = vpow.pop %v1513
      %v1515 = vmul.f32 %v1444, 1.442695
      %v1516 = vpow.pop %v1515
      %v1517 = vmul.f32 %v1445, 1.442695
      %v1518 = vpow.pop %v1517
      %v1519 = vmul.f32 %v1446, 1.442695
      %v1520 = vpow.pop %v1519
      %v1521 = vmul.f32 %v1447, 1.442695
      %v1522 = vpow.pop %v1521
      %v1523 = vmul.f32 %v1448, 1.442695
      %v1524 = vpow.pop %v1523
      %v1525 = vmul.f32 %v1449, 1.442695
      %v1526 = vpow.pop %v1525
      %v1527 = vmul.f32 %v1450, 1.442695
      %v1528 = vpow.pop %v1527
      %v1529 = vmul.f32 %v1451, 1.442695
      %v1530 = vpow.pop %v1529
      %v1531 = vmul.f32 %v1452, 1.442695
      %v1532 = vpow.pop %v1531
      %v1533 = vmul.f32 %v1453, 1.442695
      %v1534 = vpow.pop %v1533
      %v1535 = vmul.f32 %v1454, 1.442695
      %v1536 = vpow.pop %v1535
      %v1537 = vmul.f32 %v1455, 1.442695
      %v1538 = vpow.pop %v1537
      %v1539 = vmul.f32 %v1456, 1.442695
      %v1540 = vpow.pop %v1539
      %v1541 = vmul.f32 %v1457, 1.442695
      %v1542 = vpow.pop %v1541
      %v1543 = vmul.f32 %v1458, 1.442695
      %v1544 = vpow.pop %v1543
      %v1545 = vmul.f32 %v1459, 1.442695
      %v1546 = vpow.pop %v1545
      %v1547 = vmul.f32 %v1460, 1.442695
      %v1548 = vpow.pop %v1547
      %v1549 = vmul.f32 %v1461, 1.442695
      %v1550 = vpow.pop %v1549
      %v1551 = vmul.f32 %v1462, 1.442695
      %v1552 = vpow.pop %v1551
      %v1553 = vmul.f32 %v1463, 1.442695
      %v1554 = vpow.pop %v1553
      %v1555 = vmul.f32 %v1464, 1.442695
      %v1556 = vpow.pop %v1555
      %v1557 = vmul.f32 %v1465, 1.442695
      %v1558 = vpow.pop %v1557
      %v1559 = vmul.f32 %v1466, 1.442695
      %v1560 = vpow.pop %v1559
      %v1561 = vmul.f32 %v1467, 1.442695
      %v1562 = vpow.pop %v1561
      %v1563 = vmul.f32 %v1468, 1.442695
      %v1564 = vpow.pop %v1563
      %v1565 = vmul.f32 %v1469, 1.442695
      %v1566 = vpow.pop %v1565
      %v1567 = vmul.f32 %v1470, 1.442695
      %v1568 = vpow.pop %v1567
      %v1569 = vmul.f32 %v1471, 1.442695
      %v1570 = vpow.pop %v1569
      %v1571 = vmul.f32 %v1472, 1.442695
      %v1572 = vpow.pop %v1571
      %v1573 = vmul.f32 %v1473, 1.442695
      %v1574 = vpow.pop %v1573
      %v1575 = vmul.f32 %v1474, 1.442695
      %v1576 = vpow.pop %v1575
      %v1577 = vmul.f32 %v1475, 1.442695
      %v1578 = vpow.pop %v1577
      %v1579 = vmul.f32 %v1476, 1.442695
      %v1580 = vpow.pop %v1579
      %v1581 = vmul.f32 %v1477, 1.442695
      %v1582 = vpow.pop %v1581
      %v1583 = vmul.f32 %v1478, 1.442695
      %v1584 = vpow.pop %v1583
      %v1585 = vmul.f32 %v1479, 1.442695
      %v1586 = vpow.pop %v1585
      %v1587 = vmul.f32 %v1480, 1.442695
      %v1588 = vpow.pop %v1587
      %v1589 = vmul.f32 %v1481, 1.442695
      %v1590 = vpow.pop %v1589
      %v1591 = vmul.f32 %v1482, 1.442695
      %v1592 = vpow.pop %v1591
      %v1593 = vmul.f32 %v1483, 1.442695
      %v1594 = vpow.pop %v1593
      %v1595 = vmul.f32 %v1484, 1.442695
      %v1596 = vpow.pop %v1595
      %v1597 = vmul.f32 %v1485, 1.442695
      %v1598 = vpow.pop %v1597
      %v1599 = vmul.f32 %v1486, 1.442695
      %v1600 = vpow.pop %v1599
      %v1601 = vmul.f32 %v1487, 1.442695
      %v1602 = vpow.pop %v1601
      %v1603 = vmul.f32 %v1488, 1.442695
      %v1604 = vpow.pop %v1603
      %v1605 = vmul.f32 %v1489, 1.442695
      %v1606 = vpow.pop %v1605
      %v1607 = vmul.f32 %v1490, 1.442695
      %v1608 = vpow.pop %v1607
      %v1609 = vmul.f32 %v1491, 1.442695
      %v1610 = vpow.pop %v1609
      %v1611 = vmul.f32 %v1492, 1.442695
      %v1612 = vpow.pop %v1611
      %v1613 = vmul.f32 %v1493, 1.442695
      %v1614 = vpow.pop %v1613
      %v1615 = vmul.f32 %v1494, 1.442695
      %v1616 = vpow.pop %v1615
      %v1617 = vmul.f32 %v1495, 1.442695
      %v1618 = vpow.pop %v1617
      %v1619 = vmul.f32 %v1496, 1.442695
      %v1620 = vpow.pop %v1619
      %v1621 = vmul.f32 %v1497, 1.442695
      %v1622 = vpow.pop %v1621
      %v1623 = vmul.f32 %v1498, 1.442695
      %v1624 = vpow.pop %v1623
      %v1625 = vmul.f32 %v1499, 1.442695
      %v1626 = vpow.pop %v1625
      %v1627 = vmul.f32 %v1500, 1.442695
      %v1628 = vpow.pop %v1627
      %v1629 = vadd.f32 %v1502, %v1504
      %1630 = vadd.xlane.f32.xlu0 %v1629
      %v1631 = vpop.xlane.xlu0 %1630
      %v1632 = vadd.f32 %v1506, %v1508
      %1633 = vadd.xlane.f32.xlu0 %v1632
      %v1634 = vpop.xlane.xlu0 %1633
      %v1635 = vadd.f32 %v1510, %v1512
      %1636 = vadd.xlane.f32.xlu0 %v1635
      %v1637 = vpop.xlane.xlu0 %1636
      %v1638 = vadd.f32 %v1514, %v1516
      %1639 = vadd.xlane.f32.xlu0 %v1638
      %v1640 = vpop.xlane.xlu0 %1639
      %v1641 = vadd.f32 %v1518, %v1520
      %1642 = vadd.xlane.f32.xlu0 %v1641
      %v1643 = vpop.xlane.xlu0 %1642
      %v1644 = vadd.f32 %v1522, %v1524
      %1645 = vadd.xlane.f32.xlu0 %v1644
      %v1646 = vpop.xlane.xlu0 %1645
      %v1647 = vadd.f32 %v1526, %v1528
      %1648 = vadd.xlane.f32.xlu0 %v1647
      %v1649 = vpop.xlane.xlu0 %1648
      %v1650 = vadd.f32 %v1530, %v1532
      %1651 = vadd.xlane.f32.xlu0 %v1650
      %v1652 = vpop.xlane.xlu0 %1651
      %v1653 = vadd.f32 %v1534, %v1536
      %1654 = vadd.xlane.f32.xlu0 %v1653
      %v1655 = vpop.xlane.xlu0 %1654
      %v1656 = vadd.f32 %v1538, %v1540
      %1657 = vadd.xlane.f32.xlu0 %v1656
      %v1658 = vpop.xlane.xlu0 %1657
      %v1659 = vadd.f32 %v1542, %v1544
      %1660 = vadd.xlane.f32.xlu0 %v1659
      %v1661 = vpop.xlane.xlu0 %1660
      %v1662 = vadd.f32 %v1546, %v1548
      %1663 = vadd.xlane.f32.xlu0 %v1662
      %v1664 = vpop.xlane.xlu0 %1663
      %v1665 = vadd.f32 %v1550, %v1552
      %1666 = vadd.xlane.f32.xlu0 %v1665
      %v1667 = vpop.xlane.xlu0 %1666
      %v1668 = vadd.f32 %v1554, %v1556
      %1669 = vadd.xlane.f32.xlu0 %v1668
      %v1670 = vpop.xlane.xlu0 %1669
      %v1671 = vadd.f32 %v1558, %v1560
      %1672 = vadd.xlane.f32.xlu0 %v1671
      %v1673 = vpop.xlane.xlu0 %1672
      %v1674 = vadd.f32 %v1562, %v1564
      %1675 = vadd.xlane.f32.xlu0 %v1674
      %v1676 = vpop.xlane.xlu0 %1675
      %v1677 = vadd.f32 %v1566, %v1568
      %1678 = vadd.xlane.f32.xlu0 %v1677
      %v1679 = vpop.xlane.xlu0 %1678
      %v1680 = vadd.f32 %v1570, %v1572
      %1681 = vadd.xlane.f32.xlu0 %v1680
      %v1682 = vpop.xlane.xlu0 %1681
      %v1683 = vadd.f32 %v1574, %v1576
      %1684 = vadd.xlane.f32.xlu0 %v1683
      %v1685 = vpop.xlane.xlu0 %1684
      %v1686 = vadd.f32 %v1578, %v1580
      %1687 = vadd.xlane.f32.xlu0 %v1686
      %v1688 = vpop.xlane.xlu0 %1687
      %v1689 = vadd.f32 %v1582, %v1584
      %1690 = vadd.xlane.f32.xlu0 %v1689
      %v1691 = vpop.xlane.xlu0 %1690
      %v1692 = vadd.f32 %v1586, %v1588
      %1693 = vadd.xlane.f32.xlu0 %v1692
      %v1694 = vpop.xlane.xlu0 %1693
      %v1695 = vadd.f32 %v1590, %v1592
      %1696 = vadd.xlane.f32.xlu0 %v1695
      %v1697 = vpop.xlane.xlu0 %1696
      %v1698 = vadd.f32 %v1594, %v1596
      %1699 = vadd.xlane.f32.xlu0 %v1698
      %v1700 = vpop.xlane.xlu0 %1699
      %v1701 = vadd.f32 %v1598, %v1600
      %1702 = vadd.xlane.f32.xlu0 %v1701
      %v1703 = vpop.xlane.xlu0 %1702
      %v1704 = vadd.f32 %v1602, %v1604
      %1705 = vadd.xlane.f32.xlu0 %v1704
      %v1706 = vpop.xlane.xlu0 %1705
      %v1707 = vadd.f32 %v1606, %v1608
      %1708 = vadd.xlane.f32.xlu0 %v1707
      %v1709 = vpop.xlane.xlu0 %1708
      %v1710 = vadd.f32 %v1610, %v1612
      %1711 = vadd.xlane.f32.xlu0 %v1710
      %v1712 = vpop.xlane.xlu0 %1711
      %v1713 = vadd.f32 %v1614, %v1616
      %1714 = vadd.xlane.f32.xlu0 %v1713
      %v1715 = vpop.xlane.xlu0 %1714
      %v1716 = vadd.f32 %v1618, %v1620
      %1717 = vadd.xlane.f32.xlu0 %v1716
      %v1718 = vpop.xlane.xlu0 %1717
      %v1719 = vadd.f32 %v1622, %v1624
      %1720 = vadd.xlane.f32.xlu0 %v1719
      %v1721 = vpop.xlane.xlu0 %1720
      %v1722 = vadd.f32 %v1626, %v1628
      %1723 = vadd.xlane.f32.xlu0 %v1722
      %v1724 = vpop.xlane.xlu0 %1723
      %v1725 = vrcp.pop %v1631
      %v1726 = vrcp.pop %v1634
      %v1727 = vrcp.pop %v1637
      %v1728 = vrcp.pop %v1640
      %v1729 = vrcp.pop %v1643
      %v1730 = vrcp.pop %v1646
      %v1731 = vrcp.pop %v1649
      %v1732 = vrcp.pop %v1652
      %v1733 = vrcp.pop %v1655
      %v1734 = vrcp.pop %v1658
      %v1735 = vrcp.pop %v1661
      %v1736 = vrcp.pop %v1664
      %v1737 = vrcp.pop %v1667
      %v1738 = vrcp.pop %v1670
      %v1739 = vrcp.pop %v1673
      %v1740 = vrcp.pop %v1676
      %v1741 = vrcp.pop %v1679
      %v1742 = vrcp.pop %v1682
      %v1743 = vrcp.pop %v1685
      %v1744 = vrcp.pop %v1688
      %v1745 = vrcp.pop %v1691
      %v1746 = vrcp.pop %v1694
      %v1747 = vrcp.pop %v1697
      %v1748 = vrcp.pop %v1700
      %v1749 = vrcp.pop %v1703
      %v1750 = vrcp.pop %v1706
      %v1751 = vrcp.pop %v1709
      %v1752 = vrcp.pop %v1712
      %v1753 = vrcp.pop %v1715
      %v1754 = vrcp.pop %v1718
      %v1755 = vrcp.pop %v1721
      %v1756 = vrcp.pop %v1724
      %v1757 = vmul.f32 %v1502, %v1725
      %v1758 = vmul.f32 %v1504, %v1725
      %v1759 = vmul.f32 %v1506, %v1726
      %v1760 = vmul.f32 %v1508, %v1726
      %v1761 = vmul.f32 %v1510, %v1727
      %v1762 = vmul.f32 %v1512, %v1727
      %v1763 = vmul.f32 %v1514, %v1728
      %v1764 = vmul.f32 %v1516, %v1728
      %v1765 = vmul.f32 %v1518, %v1729
      %v1766 = vmul.f32 %v1520, %v1729
      %v1767 = vmul.f32 %v1522, %v1730
      %v1768 = vmul.f32 %v1524, %v1730
      %v1769 = vmul.f32 %v1526, %v1731
      %v1770 = vmul.f32 %v1528, %v1731
      %v1771 = vmul.f32 %v1530, %v1732
      %v1772 = vmul.f32 %v1532, %v1732
      %v1773 = vmul.f32 %v1534, %v1733
      %v1774 = vmul.f32 %v1536, %v1733
      %v1775 = vmul.f32 %v1538, %v1734
      %v1776 = vmul.f32 %v1540, %v1734
      %v1777 = vmul.f32 %v1542, %v1735
      %v1778 = vmul.f32 %v1544, %v1735
      %v1779 = vmul.f32 %v1546, %v1736
      %v1780 = vmul.f32 %v1548, %v1736
      %v1781 = vmul.f32 %v1550, %v1737
      %v1782 = vmul.f32 %v1552, %v1737
      %v1783 = vmul.f32 %v1554, %v1738
      %v1784 = vmul.f32 %v1556, %v1738
      %v1785 = vmul.f32 %v1558, %v1739
      %v1786 = vmul.f32 %v1560, %v1739
      %v1787 = vmul.f32 %v1562, %v1740
      %v1788 = vmul.f32 %v1564, %v1740
      %v1789 = vmul.f32 %v1566, %v1741
      %v1790 = vmul.f32 %v1568, %v1741
      %v1791 = vmul.f32 %v1570, %v1742
      %v1792 = vmul.f32 %v1572, %v1742
      %v1793 = vmul.f32 %v1574, %v1743
      %v1794 = vmul.f32 %v1576, %v1743
      %v1795 = vmul.f32 %v1578, %v1744
      %v1796 = vmul.f32 %v1580, %v1744
      %v1797 = vmul.f32 %v1582, %v1745
      %v1798 = vmul.f32 %v1584, %v1745
      %v1799 = vmul.f32 %v1586, %v1746
      %v1800 = vmul.f32 %v1588, %v1746
      %v1801 = vmul.f32 %v1590, %v1747
      %v1802 = vmul.f32 %v1592, %v1747
      %v1803 = vmul.f32 %v1594, %v1748
      %v1804 = vmul.f32 %v1596, %v1748
      %v1805 = vmul.f32 %v1598, %v1749
      %v1806 = vmul.f32 %v1600, %v1749
      %v1807 = vmul.f32 %v1602, %v1750
      %v1808 = vmul.f32 %v1604, %v1750
      %v1809 = vmul.f32 %v1606, %v1751
      %v1810 = vmul.f32 %v1608, %v1751
      %v1811 = vmul.f32 %v1610, %v1752
      %v1812 = vmul.f32 %v1612, %v1752
      %v1813 = vmul.f32 %v1614, %v1753
      %v1814 = vmul.f32 %v1616, %v1753
      %v1815 = vmul.f32 %v1618, %v1754
      %v1816 = vmul.f32 %v1620, %v1754
      %v1817 = vmul.f32 %v1622, %v1755
      %v1818 = vmul.f32 %v1624, %v1755
      %v1819 = vmul.f32 %v1626, %v1756
      %v1820 = vmul.f32 %v1628, %v1756
      %v1821 = vpack.c.bf16 %v1759, %v1757
      %v1822 = vpack.c.bf16 %v1760, %v1758
      %v1823 = vpack.c.bf16 %v1763, %v1761
      %v1824 = vpack.c.bf16 %v1764, %v1762
      %v1825 = vpack.c.bf16 %v1767, %v1765
      %v1826 = vpack.c.bf16 %v1768, %v1766
      %v1827 = vpack.c.bf16 %v1771, %v1769
      %v1828 = vpack.c.bf16 %v1772, %v1770
      %v1829 = vpack.c.bf16 %v1775, %v1773
      %v1830 = vpack.c.bf16 %v1776, %v1774
      %v1831 = vpack.c.bf16 %v1779, %v1777
      %v1832 = vpack.c.bf16 %v1780, %v1778
      %v1833 = vpack.c.bf16 %v1783, %v1781
      %v1834 = vpack.c.bf16 %v1784, %v1782
      %v1835 = vpack.c.bf16 %v1787, %v1785
      %v1836 = vpack.c.bf16 %v1788, %v1786
      %v1837 = vpack.c.bf16 %v1791, %v1789
      %v1838 = vpack.c.bf16 %v1792, %v1790
      %v1839 = vpack.c.bf16 %v1795, %v1793
      %v1840 = vpack.c.bf16 %v1796, %v1794
      %v1841 = vpack.c.bf16 %v1799, %v1797
      %v1842 = vpack.c.bf16 %v1800, %v1798
      %v1843 = vpack.c.bf16 %v1803, %v1801
      %v1844 = vpack.c.bf16 %v1804, %v1802
      %v1845 = vpack.c.bf16 %v1807, %v1805
      %v1846 = vpack.c.bf16 %v1808, %v1806
      %v1847 = vpack.c.bf16 %v1811, %v1809
      %v1848 = vpack.c.bf16 %v1812, %v1810
      %v1849 = vpack.c.bf16 %v1815, %v1813
      %v1850 = vpack.c.bf16 %v1816, %v1814
      %v1851 = vpack.c.bf16 %v1819, %v1817
      %v1852 = vpack.c.bf16 %v1820, %v1818
      %v1853 = vpack.c.bf16 %v1056, %v1056
      %v1854 = vpack.c.bf16 %v1057, %v1057
      %1855 = vmatprep.subr.bf16.mxu0 0
      %1856 = vmatpush1.bf16.xpose.msra.mxu0 0
      %1857 = vmatprep.subr.bf16.mxu0 0
      %1858 = vmatpush1.bf16.xpose.msra.mxu0 0
      %1859 = vmatprep.subr.bf16.mxu0 0
      %1860 = vmatpush1.bf16.xpose.msra.mxu0 0
      %1861 = vmatprep.subr.bf16.mxu0 0
      %1862 = vmatpush1.bf16.xpose.msra.mxu0 0
      %1863 = vmatprep.subr.bf16.mxu0 0
      %1864 = vmatpush1.bf16.xpose.msra.mxu0 0
      %1865 = vmatprep.subr.bf16.mxu0 0
      %1866 = vmatpush1.bf16.xpose.msra.mxu0 0
      %1867 = vmatprep.subr.bf16.mxu0 0
      %1868 = vmatpush1.bf16.xpose.msra.mxu0 0
      %1869 = vmatprep.subr.bf16.mxu0 %v1854
      %1870 = vmatpush1.bf16.xpose.msra.mxu0 %v1853
      %1871 = vmatprep.subr.bf16.mxu0 0
      %1872 = vmatpush2.bf16.xpose.msra.mxu0 0
      %1873 = vmatprep.subr.bf16.mxu0 0
      %1874 = vmatpush2.bf16.xpose.msra.mxu0 0
      %1875 = vmatprep.subr.bf16.mxu0 0
      %1876 = vmatpush2.bf16.xpose.msra.mxu0 0
      %1877 = vmatprep.subr.bf16.mxu0 0
      %1878 = vmatpush2.bf16.xpose.msra.mxu0 0
      %1879 = vmatprep.subr.bf16.mxu0 0
      %1880 = vmatpush2.bf16.xpose.msra.mxu0 0
      %1881 = vmatprep.subr.bf16.mxu0 0
      %1882 = vmatpush2.bf16.xpose.msra.mxu0 0
      %1883 = vmatprep.subr.bf16.mxu0 0
      %1884 = vmatpush2.bf16.xpose.msra.mxu0 0
      %1885 = vmatprep.subr.bf16.mxu0 0
      %1886 = vmatpush2.bf16.xpose.msra.mxu0 0
      %1887 = vmatprep.mubr.bf16.mxu0 %v1822
      %1888 = vmatmul.mubr.bf16.gmra.mxu0 %v1821
      %v1889 = vpop.f32.mrf.mxu0
      %v1890 = vadd.f32 0.0, %v1889
      %v1891 = vpop.f32.mrf.mxu0
      %v1892 = vpop.f32.mrf.mxu0
      %v1893 = vadd.f32 0.0, %v1892
      %v1894 = vpop.f32.mrf.mxu0
      %1895 = vmatprep.mubr.bf16.mxu0 %v1824
      %1896 = vmatmul.mubr.bf16.gmra.mxu0 %v1823
      %v1897 = vpop.f32.mrf.mxu0
      %v1898 = vadd.f32 0.0, %v1897
      %v1899 = vpop.f32.mrf.mxu0
      %v1900 = vpop.f32.mrf.mxu0
      %v1901 = vadd.f32 0.0, %v1900
      %v1902 = vpop.f32.mrf.mxu0
      %1903 = vmatprep.mubr.bf16.mxu0 %v1826
      %1904 = vmatmul.mubr.bf16.gmra.mxu0 %v1825
      %v1905 = vpop.f32.mrf.mxu0
      %v1906 = vadd.f32 0.0, %v1905
      %v1907 = vpop.f32.mrf.mxu0
      %v1908 = vpop.f32.mrf.mxu0
      %v1909 = vadd.f32 0.0, %v1908
      %v1910 = vpop.f32.mrf.mxu0
      %1911 = vmatprep.mubr.bf16.mxu0 %v1828
      %1912 = vmatmul.mubr.bf16.gmra.mxu0 %v1827
      %v1913 = vpop.f32.mrf.mxu0
      %v1914 = vadd.f32 0.0, %v1913
      %v1915 = vpop.f32.mrf.mxu0
      %v1916 = vpop.f32.mrf.mxu0
      %v1917 = vadd.f32 0.0, %v1916
      %v1918 = vpop.f32.mrf.mxu0
      %1919 = vmatprep.mubr.bf16.mxu0 %v1830
      %1920 = vmatmul.mubr.bf16.gmra.mxu0 %v1829
      %v1921 = vpop.f32.mrf.mxu0
      %v1922 = vadd.f32 0.0, %v1921
      %v1923 = vpop.f32.mrf.mxu0
      %v1924 = vpop.f32.mrf.mxu0
      %v1925 = vadd.f32 0.0, %v1924
      %v1926 = vpop.f32.mrf.mxu0
      %1927 = vmatprep.mubr.bf16.mxu0 %v1832
      %1928 = vmatmul.mubr.bf16.gmra.mxu0 %v1831
      %v1929 = vpop.f32.mrf.mxu0
      %v1930 = vadd.f32 0.0, %v1929
      %v1931 = vpop.f32.mrf.mxu0
      %v1932 = vpop.f32.mrf.mxu0
      %v1933 = vadd.f32 0.0, %v1932
      %v1934 = vpop.f32.mrf.mxu0
      %1935 = vmatprep.mubr.bf16.mxu0 %v1834
      %1936 = vmatmul.mubr.bf16.gmra.mxu0 %v1833
      %v1937 = vpop.f32.mrf.mxu0
      %v1938 = vadd.f32 0.0, %v1937
      %v1939 = vpop.f32.mrf.mxu0
      %v1940 = vpop.f32.mrf.mxu0
      %v1941 = vadd.f32 0.0, %v1940
      %v1942 = vpop.f32.mrf.mxu0
      %1943 = vmatprep.mubr.bf16.mxu0 %v1836
      %1944 = vmatmul.mubr.bf16.gmra.mxu0 %v1835
      %v1945 = vpop.f32.mrf.mxu0
      %v1946 = vadd.f32 0.0, %v1945
      %v1947 = vpop.f32.mrf.mxu0
      %v1948 = vpop.f32.mrf.mxu0
      %v1949 = vadd.f32 0.0, %v1948
      %v1950 = vpop.f32.mrf.mxu0
      %1951 = vmatprep.mubr.bf16.mxu0 %v1838
      %1952 = vmatmul.mubr.bf16.gmra.mxu0 %v1837
      %v1953 = vpop.f32.mrf.mxu0
      %v1954 = vadd.f32 0.0, %v1953
      %v1955 = vpop.f32.mrf.mxu0
      %v1956 = vpop.f32.mrf.mxu0
      %v1957 = vadd.f32 0.0, %v1956
      %v1958 = vpop.f32.mrf.mxu0
      %1959 = vmatprep.mubr.bf16.mxu0 %v1840
      %1960 = vmatmul.mubr.bf16.gmra.mxu0 %v1839
      %v1961 = vpop.f32.mrf.mxu0
      %v1962 = vadd.f32 0.0, %v1961
      %v1963 = vpop.f32.mrf.mxu0
      %v1964 = vpop.f32.mrf.mxu0
      %v1965 = vadd.f32 0.0, %v1964
      %v1966 = vpop.f32.mrf.mxu0
      %1967 = vmatprep.mubr.bf16.mxu0 %v1842
      %1968 = vmatmul.mubr.bf16.gmra.mxu0 %v1841
      %v1969 = vpop.f32.mrf.mxu0
      %v1970 = vadd.f32 0.0, %v1969
      %v1971 = vpop.f32.mrf.mxu0
      %v1972 = vpop.f32.mrf.mxu0
      %v1973 = vadd.f32 0.0, %v1972
      %v1974 = vpop.f32.mrf.mxu0
      %1975 = vmatprep.mubr.bf16.mxu0 %v1844
      %1976 = vmatmul.mubr.bf16.gmra.mxu0 %v1843
      %v1977 = vpop.f32.mrf.mxu0
      %v1978 = vadd.f32 0.0, %v1977
      %v1979 = vpop.f32.mrf.mxu0
      %v1980 = vpop.f32.mrf.mxu0
      %v1981 = vadd.f32 0.0, %v1980
      %v1982 = vpop.f32.mrf.mxu0
      %1983 = vmatprep.mubr.bf16.mxu0 %v1846
      %1984 = vmatmul.mubr.bf16.gmra.mxu0 %v1845
      %v1985 = vpop.f32.mrf.mxu0
      %v1986 = vadd.f32 0.0, %v1985
      %v1987 = vpop.f32.mrf.mxu0
      %v1988 = vpop.f32.mrf.mxu0
      %v1989 = vadd.f32 0.0, %v1988
      %v1990 = vpop.f32.mrf.mxu0
      %1991 = vmatprep.mubr.bf16.mxu0 %v1848
      %1992 = vmatmul.mubr.bf16.gmra.mxu0 %v1847
      %v1993 = vpop.f32.mrf.mxu0
      %v1994 = vadd.f32 0.0, %v1993
      %v1995 = vpop.f32.mrf.mxu0
      %v1996 = vpop.f32.mrf.mxu0
      %v1997 = vadd.f32 0.0, %v1996
      %v1998 = vpop.f32.mrf.mxu0
      %1999 = vmatprep.mubr.bf16.mxu0 %v1850
      %2000 = vmatmul.mubr.bf16.gmra.mxu0 %v1849
      %v2001 = vpop.f32.mrf.mxu0
      %v2002 = vadd.f32 0.0, %v2001
      %v2003 = vpop.f32.mrf.mxu0
      %v2004 = vpop.f32.mrf.mxu0
      %v2005 = vadd.f32 0.0, %v2004
      %v2006 = vpop.f32.mrf.mxu0
      %2007 = vmatprep.mubr.bf16.mxu0 %v1852
      %2008 = vmatmul.mubr.bf16.gmra.mxu0 %v1851
      %v2009 = vpop.f32.mrf.mxu0
      %v2010 = vadd.f32 0.0, %v2009
      %v2011 = vpop.f32.mrf.mxu0
      %v2012 = vpop.f32.mrf.mxu0
      %v2013 = vadd.f32 0.0, %v2012
      %v2014 = vpop.f32.mrf.mxu0
      %2015 = vdwg.mxu0
      %v2016 = vld [vmem:[%s6] sm:$0xf]
      %v2017 = vpack.c.bf16 %v1893, %v1890
      %v2018 = vpack.c.bf16 %v1901, %v1898
      %v2019 = vpack.c.bf16 %v1909, %v1906
      %v2020 = vpack.c.bf16 %v1917, %v1914
      %v2021 = vpack.c.bf16 %v1925, %v1922
      %v2022 = vpack.c.bf16 %v1933, %v1930
      %v2023 = vpack.c.bf16 %v1941, %v1938
      %v2024 = vpack.c.bf16 %v1949, %v1946
      %v2025 = vpack.c.bf16 %v1957, %v1954
      %v2026 = vpack.c.bf16 %v1965, %v1962
      %v2027 = vpack.c.bf16 %v1973, %v1970
      %v2028 = vpack.c.bf16 %v1981, %v1978
      %v2029 = vpack.c.bf16 %v1989, %v1986
      %v2030 = vpack.c.bf16 %v1997, %v1994
      %v2031 = vpack.c.bf16 %v2005, %v2002
      %v2032 = vpack.c.bf16 %v2013, %v2010
      %v2034 = vsel %vm905, %v2016, 0
      %v2037 = vsel %vm905, %v2017, 0
      %v2040 = vsel %vm905, %v2018, 0
      %v2043 = vsel %vm905, %v2019, 0
      %v2046 = vsel %vm905, %v2020, 0
      %v2049 = vsel %vm905, %v2021, 0
      %v2052 = vsel %vm905, %v2022, 0
      %v2055 = vsel %vm905, %v2023, 0
      %v2058 = vsel %vm905, %v2024, 0
      %v2061 = vsel %vm905, %v2025, 0
      %v2064 = vsel %vm905, %v2026, 0
      %v2067 = vsel %vm905, %v2027, 0
      %v2070 = vsel %vm905, %v2028, 0
      %v2073 = vsel %vm905, %v2029, 0
      %v2076 = vsel %vm905, %v2030, 0
      %v2079 = vsel %vm905, %v2031, 0
      %v2082 = vsel %vm905, %v2032, 0
      %2084 = vmatprep.subr.bf16.mxu0 0
      %2085 = vmatpush1.bf16.xpose.msra.mxu0 %v2058
      %2086 = vmatprep.subr.bf16.mxu0 0
      %2087 = vmatpush1.bf16.xpose.msra.mxu0 %v2055
      %2088 = vmatprep.subr.bf16.mxu0 0
      %2089 = vmatpush1.bf16.xpose.msra.mxu0 %v2052
      %2090 = vmatprep.subr.bf16.mxu0 0
      %2091 = vmatpush1.bf16.xpose.msra.mxu0 %v2049
      %2092 = vmatprep.subr.bf16.mxu0 0
      %2093 = vmatpush1.bf16.xpose.msra.mxu0 %v2046
      %2094 = vmatprep.subr.bf16.mxu0 0
      %2095 = vmatpush1.bf16.xpose.msra.mxu0 %v2043
      %2096 = vmatprep.subr.bf16.mxu0 0
      %2097 = vmatpush1.bf16.xpose.msra.mxu0 %v2040
      %2098 = vmatprep.subr.bf16.mxu0 0
      %2099 = vmatpush1.bf16.xpose.msra.mxu0 %v2037
      %2100 = vmatprep.subr.bf16.mxu0 0
      %2101 = vmatpush2.bf16.xpose.msra.mxu0 %v2082
      %2102 = vmatprep.subr.bf16.mxu0 0
      %2103 = vmatpush2.bf16.xpose.msra.mxu0 %v2079
      %2104 = vmatprep.subr.bf16.mxu0 0
      %2105 = vmatpush2.bf16.xpose.msra.mxu0 %v2076
      %2106 = vmatprep.subr.bf16.mxu0 0
      %2107 = vmatpush2.bf16.xpose.msra.mxu0 %v2073
      %2108 = vmatprep.subr.bf16.mxu0 0
      %2109 = vmatpush2.bf16.xpose.msra.mxu0 %v2070
      %2110 = vmatprep.subr.bf16.mxu0 0
      %2111 = vmatpush2.bf16.xpose.msra.mxu0 %v2067
      %2112 = vmatprep.subr.bf16.mxu0 0
      %2113 = vmatpush2.bf16.xpose.msra.mxu0 %v2064
      %2114 = vmatprep.subr.bf16.mxu0 0
      %2115 = vmatpush2.bf16.xpose.msra.mxu0 %v2061
      %2116 = vmatprep.mubr.bf16.mxu0 0
      %2117 = vmatmul.mubr.bf16.gmra.mxu0 %v2034
      %v2118 = vpop.f32.mrf.mxu0
      %v2119 = vadd.f32 0.0, %v2118
      %v2120 = vpop.f32.mrf.mxu0
      %v2121 = vadd.f32 0.0, %v2120
      %v2122 = vpop.f32.mrf.mxu0
      %v2123 = vpop.f32.mrf.mxu0
      %2124 = vdwg.mxu0
      %v2125 = vadd.f32 %v962, %v2119
      %v2126 = vadd.f32 %v963, %v2121
      %2127 = vset.pattern.permute.xlu0 5
      %2128 = vperm.xlu0 %2127, %v956
      %v2129 = vpop.permute.xlu0 %2128
      %v2131 = vadd.f32 %v2125, %v2129
      %v2132 = vadd.f32 %v2126, %v2129
      %2133 = vst [vmem:[%s349] sm:$0xff] %v2131
      %2134 = vst [vmem:[%s349 + $0x8] sm:$0xff] %v2132
      %p2135 = scmp.lt.s32.totalorder %s20, 1
      %s2136 = scalar_select %p2135, %s20, 1
      %s2137 = smul.addr %s2136, 2
      %s2138 = smul.addr %s2137, 8
      %s2139 = scalar_lea.vmem %s9, %s2138
      // Predicated region
      $region57: #{forward_pallas.1} parent=55 // pred_check
        %p2140 = pneg %p237
      $region58: #{forward_pallas.1} parent=55 // pred_check_branch
        %2142 = sbr.rel (%p2140) target = $region60
      $region59: #{forward_pallas.1} parent=55 // pred_region
        _
      $region60: #{forward_pallas.1} parent=55 // pred_fallthru
        _
    $region56: #{forward_pallas.1} parent=5 // pred_fallthru
      _
    %p2143 = scmp.le.s32.totalorder 2, %s15
    // Predicated region
    $region61: #{forward_pallas.1} parent=5 // pred_check
      %p2144 = pneg %p2143
    $region62: #{forward_pallas.1} parent=5 // pred_check_branch
      %2146 = sbr.rel (%p2144) target = $region64
    $region63: #{forward_pallas.1} parent=5 // pred_region
      %s2147 = ssub.s32 %s15, 2
      // Predicated region
      $region65: #{forward_pallas.1} parent=63 // pred_check
        %p2148 = pneg %p243
      $region66: #{forward_pallas.1} parent=63 // pred_check_branch
        %2150 = sbr.rel (%p2148) target = $region68
      $region67: #{forward_pallas.1} parent=63 // pred_region
        %p2151 = scmp.lt.s32.totalorder %s21, 1
        %s2152 = scalar_select %p2151, %s21, 1
        %s2153 = smul.addr %s2152, 2
        %s2154 = smul.addr %s2153, 8
        %s2155 = scalar_lea.vmem %s9, %s2154
      $region68: #{forward_pallas.1} parent=63 // pred_fallthru
        _
    $region64: #{forward_pallas.1} parent=5 // pred_fallthru
      _
  $region6: #{forward_pallas.1} parent=0 // loop_footer
    %s19 = sadd.s32 1, %s15
  $region7: #{forward_pallas.1} parent=0 // loop_footer_branch
    %14 = sbr.rel target = $region3
  $region8: #{forward_pallas.1} parent=0 // loop_exit
    _

</llo_original>
